<compile_context>
chip_gen: v7x
topology: tpu7x:2x2x1
jax: 0.10.0
libtpu: 0.0.40
codegen_flags: <defaults>
</compile_context>

<pallas_src>
import jax
import jax.numpy as jnp
from jax.experimental import pallas as pl
from jax.experimental.pallas import tpu as pltpu

BN_EPS = 1e-5


def time_mixing_kernel(x_ref, w_ref, b_ref, g_ref, bb_ref, o_ref, zsum_ref, zsq_ref):
    # Blocks:
    #   x_ref / o_ref : (N, S, tile_c)        w_ref : (S_out, S_in)
    #   b_ref         : (S_out, 1) f32        g_ref / bb_ref : (S, tile_c) f32
    #   zsum_ref / zsq_ref : (S, tile_c) f32 scratch (fused BN statistics)
    n = x_ref.shape[0]
    s, tc = zsum_ref.shape
    unroll = min(8, n)

    w = w_ref[...]                                       # resident fc1 weight
    # Hoist the bias broadcast out of the batch loop (JAX does not CSE it).
    b_bcast = jnp.broadcast_to(b_ref[...], (s, tc)).astype(jnp.float32)

    zsum_ref[...] = jnp.zeros_like(zsum_ref)
    zsq_ref[...] = jnp.zeros_like(zsq_ref)

    def mix_one(i, carry):
        xi = x_ref[i]                                    # (S_in, tile_c), native layout
        # fc1 over time: (S_out, S_in) @ (S_in, tile_c) straight on the MXU —
        # no transposes anywhere; operands cast to the MXU dtype, f32 accum.
        y = jnp.dot(w, xi.astype(w.dtype), preferred_element_type=jnp.float32)
        # TODO(synk): dropout(p=0.1) on relu(fc1) is stochastic; identity here
        # (inference-mode dropout), so no 1/(1-p) scaling is applied either.
        z = xi.astype(jnp.float32) + jnp.maximum(y + b_bcast, 0.0)   # residual, f32
        o_ref[i] = z.astype(o_ref.dtype)
        # Fused BatchNorm statistics (per-(s,c) feature, reduced over the batch).
        zsum_ref[...] += z
        zsq_ref[...] += z * z
        return carry

    jax.lax.fori_loop(0, n, mix_one, 0, unroll=unroll)

    # TimeBatchNorm2d == training-mode BatchNorm1d over S*C features with
    # biased batch variance.  var = E[z^2] - mean^2 (clamped for cancellation).
    inv_n = 1.0 / n
    mean = zsum_ref[...] * inv_n
    var = jnp.maximum(zsq_ref[...] * inv_n - mean * mean, 0.0)
    scale = g_ref[...] * jax.lax.rsqrt(var + BN_EPS)
    shift = bb_ref[...] - mean * scale

    def norm_one(i, carry):
        o_ref[i] = (o_ref[i].astype(jnp.float32) * scale + shift).astype(o_ref.dtype)
        return carry

    jax.lax.fori_loop(0, n, norm_one, 0, unroll=unroll)


def _vmem_policy():
    """Returns (physical_vmem_bytes, scoped_vmem_cap_bytes) for this TPU."""
    phys = 64 << 20                      # conservative default == v7x per-TC size
    try:
        phys = int(pltpu.get_tpu_info().vmem_capacity_bytes)
    except Exception:                    # detection unavailable -> stay conservative
        pass
    if phys >= (100 << 20):              # v5e / v6e: 128 MiB physical VMEM
        return phys, 96 << 20
    return phys, min(38 << 20, max(8 << 20, (phys * 3) // 5))   # v7x: 64 MiB per TC


def _choose_tile_c(N, S, C, budget_bytes, x_itemsize):
    """Channel-block width: biggest 128-multiple that fits, >=2 blocks if C>=256."""
    if C < 128:
        # A block narrower than C must have a 128-multiple lane dim, so for
        # small C the only legal (and cheapest) choice is the full channel dim.
        return C
    # Per-channel-column VMEM cost of one grid step:
    #   x + out blocks (double-buffered) + gamma/beta (double-buffered)
    #   + zsum/zsq scratch + slab-sized BN temporaries.
    per_c = (2 * 2 * x_itemsize * N * S) + (2 * 2 * 4 * S) + (2 * 4 * S) + (4 * 4 * S)
    max_c = max(int(budget_bytes // per_c), 1)
    tile = min(max_c, C)
    tile = max((tile // 128) * 128, 128)
    if tile >= C and C >= 256:
        # Keep at least two channel blocks so dimension_semantics=("parallel",)
        # can spread the grid across both v7x TensorCores; the extra grid step
        # costs ~0.35us on single-core generations.
        tile = max(128, (pl.cdiv(C, 2) // 128) * 128)
    return tile


def time_mixing(x, w, b, gamma, beta, *, mxu_dtype=jnp.bfloat16,
                block_budget_bytes=None):
    """x: (N, S, C) float32 (PyTorch module layout). Returns (N, S, C).

    mxu_dtype: dtype of the fc1 matmul operands (bf16 = native MXU path,
    f32 accumulation; None keeps full-f32 operands).  All residual / BN math
    is always f32.
    """
    N, S, C = x.shape
    x_itemsize = jnp.dtype(x.dtype).itemsize

    w_mx = w if mxu_dtype is None else w.astype(mxu_dtype)
    w_itemsize = jnp.dtype(w_mx.dtype).itemsize

    phys_vmem, vmem_cap = _vmem_policy()
    if block_budget_bytes is None:
        fixed = 2 * w_itemsize * S * S + 2 * 4 * S + (2 << 20)  # W + bias buffers + slack
        block_budget_bytes = max(vmem_cap - fixed, 4 << 20)

    tile_c = _choose_tile_c(N, S, C, block_budget_bytes, x_itemsize)
    grid = (pl.cdiv(C, tile_c),)

    # Everything that must coexist in VMEM for one grid step (worst case:
    # double-buffered params), plus headroom for slab-sized BN temporaries.
    need = (2 * 2 * x_itemsize * N * S * tile_c          # x + out blocks, 2 buffers each
            + 2 * w_itemsize * S * S + 2 * 4 * S         # W + bias (<= 2 buffers)
            + 2 * 2 * 4 * S * tile_c                     # gamma + beta blocks
            + 2 * 4 * S * tile_c                         # zsum / zsq scratch
            + 4 * 4 * S * tile_c + (2 << 20))            # BN slab temporaries + slack
    if need > vmem_cap:
        raise ValueError(
            f"TimeMixing block (N={N}, S={S}, tile_c={tile_c}) needs ~{need >> 20} MiB "
            f"of VMEM but only {vmem_cap >> 20} MiB is budgeted "
            f"(physical {phys_vmem >> 20} MiB); reduce N*S or the channel tile.")
    vmem_limit = int(min(vmem_cap, max(need, 16 << 20)))

    # Parameter plumbing (tiny, done once outside the grid):
    #   bias as an (S, 1) column so it broadcasts over channels,
    #   gamma/beta as (S, C) so BN feature s*C + c lands at [s, c].
    b_col = b.reshape(S, 1).astype(jnp.float32)
    gamma2 = gamma.reshape(S, C).astype(jnp.float32)
    beta2 = beta.reshape(S, C).astype(jnp.float32)

    flops = int(2 * N * C * S * S + 14 * N * S * C)
    transcendentals = int(S * C)
    bytes_accessed = int(2 * x_itemsize * N * S * C + w_itemsize * S * S
                         + 4 * S + 2 * 4 * S * C)

    def _in_specs(single_buffer_params):
        # W and bias never change with the grid index; single-buffer them when
        # the installed jax supports pipeline_mode (saves a full weight buffer).
        pm = {"pipeline_mode": pl.Buffered(1)} if single_buffer_params else {}
        return [
            pl.BlockSpec((N, S, tile_c), lambda c: (0, 0, c)),        # x
            pl.BlockSpec((S, S), lambda c: (0, 0), **pm),             # W (resident)
            pl.BlockSpec((S, 1), lambda c: (0, 0), **pm),             # bias (resident)
            pl.BlockSpec((S, tile_c), lambda c: (0, c)),              # gamma
            pl.BlockSpec((S, tile_c), lambda c: (0, c)),              # beta
        ]

    def _run(single_buffer_params):
        return pl.pallas_call(
            time_mixing_kernel,
            out_shape=jax.ShapeDtypeStruct((N, S, C), x.dtype),
            grid_spec=pltpu.PrefetchScalarGridSpec(
                num_scalar_prefetch=0,
                grid=grid,
                in_specs=_in_specs(single_buffer_params),
                out_specs=pl.BlockSpec((N, S, tile_c), lambda c: (0, 0, c)),
                scratch_shapes=[pltpu.VMEM((S, tile_c), jnp.float32),   # z sum
                                pltpu.VMEM((S, tile_c), jnp.float32)],  # z sum-of-squares
            ),
            compiler_params=pltpu.CompilerParams(
                dimension_semantics=("parallel",),
                vmem_limit_bytes=vmem_limit,
            ),
            cost_estimate=pl.CostEstimate(
                flops=flops, transcendentals=transcendentals,
                bytes_accessed=bytes_accessed),
        )(x, w_mx, b_col, gamma2, beta2)

    try:
        return _run(True)
    except Exception:
        # pipeline_mode=pl.Buffered(1) unsupported on this jax/Mosaic version:
        # fall back to default (double-buffered) parameter specs.
        return _run(False)


def time_mixing_reference(x, w, b, gamma, beta, *, mxu_dtype=None):
    """Pure-JAX mirror of the PyTorch forward (dropout = identity).

    mxu_dtype mirrors the kernel's matmul-operand precision policy so the two
    can be compared like-for-like.
    """
    N, S, C = x.shape
    x_t = jnp.transpose(x, (0, 2, 1))                         # (N, C, S)
    if mxu_dtype is not None:
        y = jnp.dot(x_t.astype(mxu_dtype), w.T.astype(mxu_dtype),
                    preferred_element_type=jnp.float32) + b
    else:
        y = jnp.dot(x_t, w.T) + b
    y = jnp.maximum(y, 0.0)
    x_res = jnp.transpose(y, (0, 2, 1)).astype(jnp.float32)   # (N, S, C)
    z = (x.astype(jnp.float32) + x_res).reshape(N, S * C)
    mean = z.mean(axis=0)
    var = ((z - mean) ** 2).mean(axis=0)                      # biased, training BN
    out = gamma * (z - mean) / jnp.sqrt(var + BN_EPS) + beta
    return out.reshape(N, S, C).astype(x.dtype)


if __name__ == "__main__":
    N, S, C = 4, 32, 16  # batch, sequence_length, input_channels

    key = jax.random.PRNGKey(0)
    kx, kw, kb, kg, kbeta = jax.random.split(key, 5)

    x = jax.random.normal(kx, (N, S, C), dtype=jnp.float32)
    bound = 1.0 / (S ** 0.5)
    # fc1: nn.Linear(S, S) -- weight (S_out, S_in), bias (S,)
    w = jax.random.uniform(kw, (S, S), jnp.float32, -bound, bound)
    b = jax.random.uniform(kb, (S,), jnp.float32, -bound, bound)
    # TimeBatchNorm2d affine params over S*C features (randomized so the
    # gamma/beta layout mapping is actually exercised).
    gamma = 1.0 + 0.1 * jax.random.normal(kg, (S * C,), dtype=jnp.float32)
    beta = 0.1 * jax.random.normal(kbeta, (S * C,), dtype=jnp.float32)

    # Default performance path: bf16 MXU operands, f32 accumulation and BN math.
    out = jax.block_until_ready(time_mixing(x, w, b, gamma, beta))
    ref = jax.block_until_ready(
        time_mixing_reference(x, w, b, gamma, beta, mxu_dtype=jnp.bfloat16))
    assert out.shape == (N, S, C)
    assert bool(jnp.allclose(out, ref, rtol=2e-3, atol=2e-3)), "bf16-MXU path mismatch"

    # Full-f32 MXU-operand path also compiles and runs (precision fallback).
    out_f32 = jax.block_until_ready(time_mixing(x, w, b, gamma, beta, mxu_dtype=None))
    assert out_f32.shape == (N, S, C)
    assert bool(jnp.all(jnp.isfinite(out_f32)))

    print("KERNEL_OK")
</pallas_src>

<mosaic_0001>
module attributes {stable_mosaic.version = 11 : i64} {
  func.func @time_mixing_kernel(%arg0: i32, %arg1: memref<4x32x16xf32, #tpu.memory_space<vmem>>, %arg2: memref<32x32xbf16, #tpu.memory_space<vmem>>, %arg3: memref<32x1xf32, #tpu.memory_space<vmem>>, %arg4: memref<32x16xf32, #tpu.memory_space<vmem>>, %arg5: memref<32x16xf32, #tpu.memory_space<vmem>>, %arg6: memref<4x32x16xf32, #tpu.memory_space<vmem>>, %arg7: memref<32x16xf32, #tpu.memory_space<vmem>>, %arg8: memref<32x16xf32, #tpu.memory_space<vmem>>) attributes {dimension_semantics = [#tpu.dimension_semantics<parallel>], iteration_bounds = array<i64: 1>, scalar_prefetch = 0 : i64, scratch_operands = 2 : i64, tpu.core_type = #tpu.core_type<tc>, window_params = [{transform_indices = @transform_0, window_bounds = array<i64: 4, 32, 16>}, {pipeline_mode = #tpu.pipeline_mode<synchronous>, transform_indices = @transform_1, window_bounds = array<i64: 32, 32>}, {pipeline_mode = #tpu.pipeline_mode<synchronous>, transform_indices = @transform_2, window_bounds = array<i64: 32, 1>}, {transform_indices = @transform_3, window_bounds = array<i64: 32, 16>}, {transform_indices = @transform_4, window_bounds = array<i64: 32, 16>}, {transform_indices = @transform_5, window_bounds = array<i64: 4, 32, 16>}]} {
    %c0 = arith.constant 0 : index
    %c0_0 = arith.constant 0 : index
    %0 = vector.load %arg2[%c0, %c0_0] : memref<32x32xbf16, #tpu.memory_space<vmem>>, vector<32x32xbf16>
    %c0_1 = arith.constant 0 : index
    %c0_2 = arith.constant 0 : index
    %1 = vector.load %arg3[%c0_1, %c0_2] : memref<32x1xf32, #tpu.memory_space<vmem>>, vector<32x1xf32>
    %2 = vector.shape_cast %1 : vector<32x1xf32> to vector<32x1xf32>
    %3 = vector.broadcast %2 : vector<32x1xf32> to vector<32x16xf32>
    %cst = arith.constant 0.000000e+00 : f32
    %4 = vector.broadcast %cst : f32 to vector<32x16xf32>
    %c0_3 = arith.constant 0 : index
    %c0_4 = arith.constant 0 : index
    %5 = vector.load %arg7[%c0_3, %c0_4] : memref<32x16xf32, #tpu.memory_space<vmem>>, vector<32x16xf32>
    tpu.vector_store %arg7[%c0_3, %c0_4], %4 {strides = array<i32>} : memref<32x16xf32, #tpu.memory_space<vmem>>, vector<32x16xf32>,
    %cst_5 = arith.constant 0.000000e+00 : f32
    %6 = vector.broadcast %cst_5 : f32 to vector<32x16xf32>
    %c0_6 = arith.constant 0 : index
    %c0_7 = arith.constant 0 : index
    %7 = vector.load %arg8[%c0_6, %c0_7] : memref<32x16xf32, #tpu.memory_space<vmem>>, vector<32x16xf32>
    tpu.vector_store %arg8[%c0_6, %c0_7], %6 {strides = array<i32>} : memref<32x16xf32, #tpu.memory_space<vmem>>, vector<32x16xf32>,
    %c0_i32 = arith.constant 0 : i32
    %8 = arith.index_cast %c0_i32 : i32 to index
    %c0_8 = arith.constant 0 : index
    %c0_9 = arith.constant 0 : index
    %9 = vector.load %arg1[%8, %c0_8, %c0_9] : memref<4x32x16xf32, #tpu.memory_space<vmem>>, vector<1x32x16xf32>
    %10 = vector.shape_cast %9 : vector<1x32x16xf32> to vector<32x16xf32>
    %11 = arith.truncf %10 : vector<32x16xf32> to vector<32x16xbf16>
    %cst_10 = arith.constant dense<0.000000e+00> : vector<32x16xf32>
    %12 = tpu.matmul %0, %11, %cst_10 {dimension_numbers = #tpu.dot_dimension_numbers<[1], [0], [0], [1], [0, 0, 1, 1], [], []>} : vector<32x32xbf16>, vector<32x16xbf16>, vector<32x16xf32> -> vector<32x16xf32>
    %13 = arith.addf %12, %3 : vector<32x16xf32>
    %cst_11 = arith.constant 0.000000e+00 : f32
    %14 = vector.broadcast %cst_11 : f32 to vector<32x16xf32>
    %15 = arith.maximumf %13, %14 : vector<32x16xf32>
    %16 = arith.addf %10, %15 : vector<32x16xf32>
    %17 = arith.index_cast %c0_i32 : i32 to index
    %c0_12 = arith.constant 0 : index
    %c0_13 = arith.constant 0 : index
    %18 = vector.load %arg6[%17, %c0_12, %c0_13] : memref<4x32x16xf32, #tpu.memory_space<vmem>>, vector<1x32x16xf32>
    %19 = vector.shape_cast %18 : vector<1x32x16xf32> to vector<32x16xf32>
    %20 = vector.shape_cast %16 : vector<32x16xf32> to vector<1x32x16xf32>
    tpu.vector_store %arg6[%17, %c0_12, %c0_13], %20 {strides = array<i32>} : memref<4x32x16xf32, #tpu.memory_space<vmem>>, vector<1x32x16xf32>,
    %c0_14 = arith.constant 0 : index
    %c0_15 = arith.constant 0 : index
    %21 = vector.load %arg7[%c0_14, %c0_15] : memref<32x16xf32, #tpu.memory_space<vmem>>, vector<32x16xf32>
    %22 = arith.addf %21, %16 : vector<32x16xf32>
    %c0_16 = arith.constant 0 : index
    %c0_17 = arith.constant 0 : index
    %23 = vector.load %arg7[%c0_16, %c0_17] : memref<32x16xf32, #tpu.memory_space<vmem>>, vector<32x16xf32>
    tpu.vector_store %arg7[%c0_16, %c0_17], %22 {strides = array<i32>} : memref<32x16xf32, #tpu.memory_space<vmem>>, vector<32x16xf32>,
    %c0_18 = arith.constant 0 : index
    %c0_19 = arith.constant 0 : index
    %24 = vector.load %arg8[%c0_18, %c0_19] : memref<32x16xf32, #tpu.memory_space<vmem>>, vector<32x16xf32>
    %25 = arith.mulf %16, %16 : vector<32x16xf32>
    %26 = arith.addf %24, %25 : vector<32x16xf32>
    %c0_20 = arith.constant 0 : index
    %c0_21 = arith.constant 0 : index
    %27 = vector.load %arg8[%c0_20, %c0_21] : memref<32x16xf32, #tpu.memory_space<vmem>>, vector<32x16xf32>
    tpu.vector_store %arg8[%c0_20, %c0_21], %26 {strides = array<i32>} : memref<32x16xf32, #tpu.memory_space<vmem>>, vector<32x16xf32>,
    %c1_i32 = arith.constant 1 : i32
    %28 = arith.index_cast %c1_i32 : i32 to index
    %c0_22 = arith.constant 0 : index
    %c0_23 = arith.constant 0 : index
    %29 = vector.load %arg1[%28, %c0_22, %c0_23] : memref<4x32x16xf32, #tpu.memory_space<vmem>>, vector<1x32x16xf32>
    %30 = vector.shape_cast %29 : vector<1x32x16xf32> to vector<32x16xf32>
    %31 = arith.truncf %30 : vector<32x16xf32> to vector<32x16xbf16>
    %cst_24 = arith.constant dense<0.000000e+00> : vector<32x16xf32>
    %32 = tpu.matmul %0, %31, %cst_24 {dimension_numbers = #tpu.dot_dimension_numbers<[1], [0], [0], [1], [0, 0, 1, 1], [], []>} : vector<32x32xbf16>, vector<32x16xbf16>, vector<32x16xf32> -> vector<32x16xf32>
    %33 = arith.addf %32, %3 : vector<32x16xf32>
    %cst_25 = arith.constant 0.000000e+00 : f32
    %34 = vector.broadcast %cst_25 : f32 to vector<32x16xf32>
    %35 = arith.maximumf %33, %34 : vector<32x16xf32>
    %36 = arith.addf %30, %35 : vector<32x16xf32>
    %37 = arith.index_cast %c1_i32 : i32 to index
    %c0_26 = arith.constant 0 : index
    %c0_27 = arith.constant 0 : index
    %38 = vector.load %arg6[%37, %c0_26, %c0_27] : memref<4x32x16xf32, #tpu.memory_space<vmem>>, vector<1x32x16xf32>
    %39 = vector.shape_cast %38 : vector<1x32x16xf32> to vector<32x16xf32>
    %40 = vector.shape_cast %36 : vector<32x16xf32> to vector<1x32x16xf32>
    tpu.vector_store %arg6[%37, %c0_26, %c0_27], %40 {strides = array<i32>} : memref<4x32x16xf32, #tpu.memory_space<vmem>>, vector<1x32x16xf32>,
    %c0_28 = arith.constant 0 : index
    %c0_29 = arith.constant 0 : index
    %41 = vector.load %arg7[%c0_28, %c0_29] : memref<32x16xf32, #tpu.memory_space<vmem>>, vector<32x16xf32>
    %42 = arith.addf %41, %36 : vector<32x16xf32>
    %c0_30 = arith.constant 0 : index
    %c0_31 = arith.constant 0 : index
    %43 = vector.load %arg7[%c0_30, %c0_31] : memref<32x16xf32, #tpu.memory_space<vmem>>, vector<32x16xf32>
    tpu.vector_store %arg7[%c0_30, %c0_31], %42 {strides = array<i32>} : memref<32x16xf32, #tpu.memory_space<vmem>>, vector<32x16xf32>,
    %c0_32 = arith.constant 0 : index
    %c0_33 = arith.constant 0 : index
    %44 = vector.load %arg8[%c0_32, %c0_33] : memref<32x16xf32, #tpu.memory_space<vmem>>, vector<32x16xf32>
    %45 = arith.mulf %36, %36 : vector<32x16xf32>
    %46 = arith.addf %44, %45 : vector<32x16xf32>
    %c0_34 = arith.constant 0 : index
    %c0_35 = arith.constant 0 : index
    %47 = vector.load %arg8[%c0_34, %c0_35] : memref<32x16xf32, #tpu.memory_space<vmem>>, vector<32x16xf32>
    tpu.vector_store %arg8[%c0_34, %c0_35], %46 {strides = array<i32>} : memref<32x16xf32, #tpu.memory_space<vmem>>, vector<32x16xf32>,
    %c2_i32 = arith.constant 2 : i32
    %48 = arith.index_cast %c2_i32 : i32 to index
    %c0_36 = arith.constant 0 : index
    %c0_37 = arith.constant 0 : index
    %49 = vector.load %arg1[%48, %c0_36, %c0_37] : memref<4x32x16xf32, #tpu.memory_space<vmem>>, vector<1x32x16xf32>
    %50 = vector.shape_cast %49 : vector<1x32x16xf32> to vector<32x16xf32>
    %51 = arith.truncf %50 : vector<32x16xf32> to vector<32x16xbf16>
    %cst_38 = arith.constant dense<0.000000e+00> : vector<32x16xf32>
    %52 = tpu.matmul %0, %51, %cst_38 {dimension_numbers = #tpu.dot_dimension_numbers<[1], [0], [0], [1], [0, 0, 1, 1], [], []>} : vector<32x32xbf16>, vector<32x16xbf16>, vector<32x16xf32> -> vector<32x16xf32>
    %53 = arith.addf %52, %3 : vector<32x16xf32>
    %cst_39 = arith.constant 0.000000e+00 : f32
    %54 = vector.broadcast %cst_39 : f32 to vector<32x16xf32>
    %55 = arith.maximumf %53, %54 : vector<32x16xf32>
    %56 = arith.addf %50, %55 : vector<32x16xf32>
    %57 = arith.index_cast %c2_i32 : i32 to index
    %c0_40 = arith.constant 0 : index
    %c0_41 = arith.constant 0 : index
    %58 = vector.load %arg6[%57, %c0_40, %c0_41] : memref<4x32x16xf32, #tpu.memory_space<vmem>>, vector<1x32x16xf32>
    %59 = vector.shape_cast %58 : vector<1x32x16xf32> to vector<32x16xf32>
    %60 = vector.shape_cast %56 : vector<32x16xf32> to vector<1x32x16xf32>
    tpu.vector_store %arg6[%57, %c0_40, %c0_41], %60 {strides = array<i32>} : memref<4x32x16xf32, #tpu.memory_space<vmem>>, vector<1x32x16xf32>,
    %c0_42 = arith.constant 0 : index
    %c0_43 = arith.constant 0 : index
    %61 = vector.load %arg7[%c0_42, %c0_43] : memref<32x16xf32, #tpu.memory_space<vmem>>, vector<32x16xf32>
    %62 = arith.addf %61, %56 : vector<32x16xf32>
    %c0_44 = arith.constant 0 : index
    %c0_45 = arith.constant 0 : index
    %63 = vector.load %arg7[%c0_44, %c0_45] : memref<32x16xf32, #tpu.memory_space<vmem>>, vector<32x16xf32>
    tpu.vector_store %arg7[%c0_44, %c0_45], %62 {strides = array<i32>} : memref<32x16xf32, #tpu.memory_space<vmem>>, vector<32x16xf32>,
    %c0_46 = arith.constant 0 : index
    %c0_47 = arith.constant 0 : index
    %64 = vector.load %arg8[%c0_46, %c0_47] : memref<32x16xf32, #tpu.memory_space<vmem>>, vector<32x16xf32>
    %65 = arith.mulf %56, %56 : vector<32x16xf32>
    %66 = arith.addf %64, %65 : vector<32x16xf32>
    %c0_48 = arith.constant 0 : index
    %c0_49 = arith.constant 0 : index
    %67 = vector.load %arg8[%c0_48, %c0_49] : memref<32x16xf32, #tpu.memory_space<vmem>>, vector<32x16xf32>
    tpu.vector_store %arg8[%c0_48, %c0_49], %66 {strides = array<i32>} : memref<32x16xf32, #tpu.memory_space<vmem>>, vector<32x16xf32>,
    %c3_i32 = arith.constant 3 : i32
    %68 = arith.index_cast %c3_i32 : i32 to index
    %c0_50 = arith.constant 0 : index
    %c0_51 = arith.constant 0 : index
    %69 = vector.load %arg1[%68, %c0_50, %c0_51] : memref<4x32x16xf32, #tpu.memory_space<vmem>>, vector<1x32x16xf32>
    %70 = vector.shape_cast %69 : vector<1x32x16xf32> to vector<32x16xf32>
    %71 = arith.truncf %70 : vector<32x16xf32> to vector<32x16xbf16>
    %cst_52 = arith.constant dense<0.000000e+00> : vector<32x16xf32>
    %72 = tpu.matmul %0, %71, %cst_52 {dimension_numbers = #tpu.dot_dimension_numbers<[1], [0], [0], [1], [0, 0, 1, 1], [], []>} : vector<32x32xbf16>, vector<32x16xbf16>, vector<32x16xf32> -> vector<32x16xf32>
    %73 = arith.addf %72, %3 : vector<32x16xf32>
    %cst_53 = arith.constant 0.000000e+00 : f32
    %74 = vector.broadcast %cst_53 : f32 to vector<32x16xf32>
    %75 = arith.maximumf %73, %74 : vector<32x16xf32>
    %76 = arith.addf %70, %75 : vector<32x16xf32>
    %77 = arith.index_cast %c3_i32 : i32 to index
    %c0_54 = arith.constant 0 : index
    %c0_55 = arith.constant 0 : index
    %78 = vector.load %arg6[%77, %c0_54, %c0_55] : memref<4x32x16xf32, #tpu.memory_space<vmem>>, vector<1x32x16xf32>
    %79 = vector.shape_cast %78 : vector<1x32x16xf32> to vector<32x16xf32>
    %80 = vector.shape_cast %76 : vector<32x16xf32> to vector<1x32x16xf32>
    tpu.vector_store %arg6[%77, %c0_54, %c0_55], %80 {strides = array<i32>} : memref<4x32x16xf32, #tpu.memory_space<vmem>>, vector<1x32x16xf32>,
    %c0_56 = arith.constant 0 : index
    %c0_57 = arith.constant 0 : index
    %81 = vector.load %arg7[%c0_56, %c0_57] : memref<32x16xf32, #tpu.memory_space<vmem>>, vector<32x16xf32>
    %82 = arith.addf %81, %76 : vector<32x16xf32>
    %c0_58 = arith.constant 0 : index
    %c0_59 = arith.constant 0 : index
    %83 = vector.load %arg7[%c0_58, %c0_59] : memref<32x16xf32, #tpu.memory_space<vmem>>, vector<32x16xf32>
    tpu.vector_store %arg7[%c0_58, %c0_59], %82 {strides = array<i32>} : memref<32x16xf32, #tpu.memory_space<vmem>>, vector<32x16xf32>,
    %c0_60 = arith.constant 0 : index
    %c0_61 = arith.constant 0 : index
    %84 = vector.load %arg8[%c0_60, %c0_61] : memref<32x16xf32, #tpu.memory_space<vmem>>, vector<32x16xf32>
    %85 = arith.mulf %76, %76 : vector<32x16xf32>
    %86 = arith.addf %84, %85 : vector<32x16xf32>
    %c0_62 = arith.constant 0 : index
    %c0_63 = arith.constant 0 : index
    %87 = vector.load %arg8[%c0_62, %c0_63] : memref<32x16xf32, #tpu.memory_space<vmem>>, vector<32x16xf32>
    tpu.vector_store %arg8[%c0_62, %c0_63], %86 {strides = array<i32>} : memref<32x16xf32, #tpu.memory_space<vmem>>, vector<32x16xf32>,
    %c4_i32 = arith.constant 4 : i32
    %c0_64 = arith.constant 0 : index
    %c0_65 = arith.constant 0 : index
    %88 = vector.load %arg7[%c0_64, %c0_65] : memref<32x16xf32, #tpu.memory_space<vmem>>, vector<32x16xf32>
    %cst_66 = arith.constant 2.500000e-01 : f32
    %89 = vector.broadcast %cst_66 : f32 to vector<32x16xf32>
    %90 = arith.mulf %88, %89 : vector<32x16xf32>
    %c0_67 = arith.constant 0 : index
    %c0_68 = arith.constant 0 : index
    %91 = vector.load %arg8[%c0_67, %c0_68] : memref<32x16xf32, #tpu.memory_space<vmem>>, vector<32x16xf32>
    %cst_69 = arith.constant 2.500000e-01 : f32
    %92 = vector.broadcast %cst_69 : f32 to vector<32x16xf32>
    %93 = arith.mulf %91, %92 : vector<32x16xf32>
    %94 = arith.mulf %90, %90 : vector<32x16xf32>
    %95 = arith.subf %93, %94 : vector<32x16xf32>
    %cst_70 = arith.constant 0.000000e+00 : f32
    %96 = vector.broadcast %cst_70 : f32 to vector<32x16xf32>
    %97 = arith.maximumf %95, %96 : vector<32x16xf32>
    %c0_71 = arith.constant 0 : index
    %c0_72 = arith.constant 0 : index
    %98 = vector.load %arg4[%c0_71, %c0_72] : memref<32x16xf32, #tpu.memory_space<vmem>>, vector<32x16xf32>
    %cst_73 = arith.constant 9.99999974E-6 : f32
    %99 = vector.broadcast %cst_73 : f32 to vector<32x16xf32>
    %100 = arith.addf %97, %99 : vector<32x16xf32>
    %101 = math.rsqrt %100 : vector<32x16xf32>
    %102 = arith.mulf %98, %101 : vector<32x16xf32>
    %c0_74 = arith.constant 0 : index
    %c0_75 = arith.constant 0 : index
    %103 = vector.load %arg5[%c0_74, %c0_75] : memref<32x16xf32, #tpu.memory_space<vmem>>, vector<32x16xf32>
    %104 = arith.mulf %90, %102 : vector<32x16xf32>
    %105 = arith.subf %103, %104 : vector<32x16xf32>
    %c0_i32_76 = arith.constant 0 : i32
    %106 = arith.index_cast %c0_i32_76 : i32 to index
    %c0_77 = arith.constant 0 : index
    %c0_78 = arith.constant 0 : index
    %107 = vector.load %arg6[%106, %c0_77, %c0_78] : memref<4x32x16xf32, #tpu.memory_space<vmem>>, vector<1x32x16xf32>
    %108 = vector.shape_cast %107 : vector<1x32x16xf32> to vector<32x16xf32>
    %109 = arith.mulf %108, %102 : vector<32x16xf32>
    %110 = arith.addf %109, %105 : vector<32x16xf32>
    %111 = arith.index_cast %c0_i32_76 : i32 to index
    %c0_79 = arith.constant 0 : index
    %c0_80 = arith.constant 0 : index
    %112 = vector.load %arg6[%111, %c0_79, %c0_80] : memref<4x32x16xf32, #tpu.memory_space<vmem>>, vector<1x32x16xf32>
    %113 = vector.shape_cast %112 : vector<1x32x16xf32> to vector<32x16xf32>
    %114 = vector.shape_cast %110 : vector<32x16xf32> to vector<1x32x16xf32>
    tpu.vector_store %arg6[%111, %c0_79, %c0_80], %114 {strides = array<i32>} : memref<4x32x16xf32, #tpu.memory_space<vmem>>, vector<1x32x16xf32>,
    %c1_i32_81 = arith.constant 1 : i32
    %115 = arith.index_cast %c1_i32_81 : i32 to index
    %c0_82 = arith.constant 0 : index
    %c0_83 = arith.constant 0 : index
    %116 = vector.load %arg6[%115, %c0_82, %c0_83] : memref<4x32x16xf32, #tpu.memory_space<vmem>>, vector<1x32x16xf32>
    %117 = vector.shape_cast %116 : vector<1x32x16xf32> to vector<32x16xf32>
    %118 = arith.mulf %117, %102 : vector<32x16xf32>
    %119 = arith.addf %118, %105 : vector<32x16xf32>
    %120 = arith.index_cast %c1_i32_81 : i32 to index
    %c0_84 = arith.constant 0 : index
    %c0_85 = arith.constant 0 : index
    %121 = vector.load %arg6[%120, %c0_84, %c0_85] : memref<4x32x16xf32, #tpu.memory_space<vmem>>, vector<1x32x16xf32>
    %122 = vector.shape_cast %121 : vector<1x32x16xf32> to vector<32x16xf32>
    %123 = vector.shape_cast %119 : vector<32x16xf32> to vector<1x32x16xf32>
    tpu.vector_store %arg6[%120, %c0_84, %c0_85], %123 {strides = array<i32>} : memref<4x32x16xf32, #tpu.memory_space<vmem>>, vector<1x32x16xf32>,
    %c2_i32_86 = arith.constant 2 : i32
    %124 = arith.index_cast %c2_i32_86 : i32 to index
    %c0_87 = arith.constant 0 : index
    %c0_88 = arith.constant 0 : index
    %125 = vector.load %arg6[%124, %c0_87, %c0_88] : memref<4x32x16xf32, #tpu.memory_space<vmem>>, vector<1x32x16xf32>
    %126 = vector.shape_cast %125 : vector<1x32x16xf32> to vector<32x16xf32>
    %127 = arith.mulf %126, %102 : vector<32x16xf32>
    %128 = arith.addf %127, %105 : vector<32x16xf32>
    %129 = arith.index_cast %c2_i32_86 : i32 to index
    %c0_89 = arith.constant 0 : index
    %c0_90 = arith.constant 0 : index
    %130 = vector.load %arg6[%129, %c0_89, %c0_90] : memref<4x32x16xf32, #tpu.memory_space<vmem>>, vector<1x32x16xf32>
    %131 = vector.shape_cast %130 : vector<1x32x16xf32> to vector<32x16xf32>
    %132 = vector.shape_cast %128 : vector<32x16xf32> to vector<1x32x16xf32>
    tpu.vector_store %arg6[%129, %c0_89, %c0_90], %132 {strides = array<i32>} : memref<4x32x16xf32, #tpu.memory_space<vmem>>, vector<1x32x16xf32>,
    %c3_i32_91 = arith.constant 3 : i32
    %133 = arith.index_cast %c3_i32_91 : i32 to index
    %c0_92 = arith.constant 0 : index
    %c0_93 = arith.constant 0 : index
    %134 = vector.load %arg6[%133, %c0_92, %c0_93] : memref<4x32x16xf32, #tpu.memory_space<vmem>>, vector<1x32x16xf32>
    %135 = vector.shape_cast %134 : vector<1x32x16xf32> to vector<32x16xf32>
    %136 = arith.mulf %135, %102 : vector<32x16xf32>
    %137 = arith.addf %136, %105 : vector<32x16xf32>
    %138 = arith.index_cast %c3_i32_91 : i32 to index
    %c0_94 = arith.constant 0 : index
    %c0_95 = arith.constant 0 : index
    %139 = vector.load %arg6[%138, %c0_94, %c0_95] : memref<4x32x16xf32, #tpu.memory_space<vmem>>, vector<1x32x16xf32>
    %140 = vector.shape_cast %139 : vector<1x32x16xf32> to vector<32x16xf32>
    %141 = vector.shape_cast %137 : vector<32x16xf32> to vector<1x32x16xf32>
    tpu.vector_store %arg6[%138, %c0_94, %c0_95], %141 {strides = array<i32>} : memref<4x32x16xf32, #tpu.memory_space<vmem>>, vector<1x32x16xf32>,
    %c4_i32_96 = arith.constant 4 : i32
    return
  }
  func.func @transform_0(%arg0: i32) -> (i32, i32, i32) {
    %c0_i32 = arith.constant 0 : i32
    %c0_i32_0 = arith.constant 0 : i32
    %c0_i32_1 = arith.constant 0 : i32
    return %c0_i32, %c0_i32_0, %arg0 : i32, i32, i32
  }
  func.func @transform_1(%arg0: i32) -> (i32, i32) {
    %c0_i32 = arith.constant 0 : i32
    %c0_i32_0 = arith.constant 0 : i32
    %c0_i32_1 = arith.constant 0 : i32
    return %c0_i32, %c0_i32_0 : i32, i32
  }
  func.func @transform_2(%arg0: i32) -> (i32, i32) {
    %c0_i32 = arith.constant 0 : i32
    %c0_i32_0 = arith.constant 0 : i32
    %c0_i32_1 = arith.constant 0 : i32
    return %c0_i32, %c0_i32_0 : i32, i32
  }
  func.func @transform_3(%arg0: i32) -> (i32, i32) {
    %c0_i32 = arith.constant 0 : i32
    %c0_i32_0 = arith.constant 0 : i32
    return %c0_i32, %arg0 : i32, i32
  }
  func.func @transform_4(%arg0: i32) -> (i32, i32) {
    %c0_i32 = arith.constant 0 : i32
    %c0_i32_0 = arith.constant 0 : i32
    return %c0_i32, %arg0 : i32, i32
  }
  func.func @transform_5(%arg0: i32) -> (i32, i32, i32) {
    %c0_i32 = arith.constant 0 : i32
    %c0_i32_0 = arith.constant 0 : i32
    %c0_i32_1 = arith.constant 0 : i32
    return %c0_i32, %c0_i32_0, %arg0 : i32, i32, i32
  }
}

module attributes {stable_mosaic.version = 11 : i64} {
  func.func @time_mixing_kernel(%arg0: i32, %arg1: memref<4x32x16xf32, #tpu.memory_space<vmem>>, %arg2: memref<32x32xbf16, #tpu.memory_space<vmem>>, %arg3: memref<32x1xf32, #tpu.memory_space<vmem>>, %arg4: memref<32x16xf32, #tpu.memory_space<vmem>>, %arg5: memref<32x16xf32, #tpu.memory_space<vmem>>, %arg6: memref<4x32x16xf32, #tpu.memory_space<vmem>>, %arg7: memref<32x16xf32, #tpu.memory_space<vmem>>, %arg8: memref<32x16xf32, #tpu.memory_space<vmem>>) attributes {dimension_semantics = [#tpu.dimension_semantics<parallel>], iteration_bounds = array<i64: 1>, scalar_prefetch = 0 : i64, scratch_operands = 2 : i64, tpu.core_type = #tpu.core_type<tc>, window_params = [{transform_indices = @transform_0, window_bounds = array<i64: 4, 32, 16>}, {pipeline_mode = #tpu.pipeline_mode<synchronous>, transform_indices = @transform_1, window_bounds = array<i64: 32, 32>}, {pipeline_mode = #tpu.pipeline_mode<synchronous>, transform_indices = @transform_2, window_bounds = array<i64: 32, 1>}, {transform_indices = @transform_3, window_bounds = array<i64: 32, 16>}, {transform_indices = @transform_4, window_bounds = array<i64: 32, 16>}, {transform_indices = @transform_5, window_bounds = array<i64: 4, 32, 16>}]} {
    %c0 = arith.constant 0 : index
    %c0_0 = arith.constant 0 : index
    %0 = vector.load %arg2[%c0, %c0_0] : memref<32x32xbf16, #tpu.memory_space<vmem>>, vector<32x32xbf16>
    %c0_1 = arith.constant 0 : index
    %c0_2 = arith.constant 0 : index
    %1 = vector.load %arg3[%c0_1, %c0_2] : memref<32x1xf32, #tpu.memory_space<vmem>>, vector<32x1xf32>
    %2 = vector.shape_cast %1 : vector<32x1xf32> to vector<32x1xf32>
    %3 = vector.broadcast %2 : vector<32x1xf32> to vector<32x16xf32>
    %cst = arith.constant 0.000000e+00 : f32
    %4 = vector.broadcast %cst : f32 to vector<32x16xf32>
    %c0_3 = arith.constant 0 : index
    %c0_4 = arith.constant 0 : index
    %5 = vector.load %arg7[%c0_3, %c0_4] : memref<32x16xf32, #tpu.memory_space<vmem>>, vector<32x16xf32>
    tpu.vector_store %arg7[%c0_3, %c0_4], %4 {strides = array<i32>} : memref<32x16xf32, #tpu.memory_space<vmem>>, vector<32x16xf32>,
    %cst_5 = arith.constant 0.000000e+00 : f32
    %6 = vector.broadcast %cst_5 : f32 to vector<32x16xf32>
    %c0_6 = arith.constant 0 : index
    %c0_7 = arith.constant 0 : index
    %7 = vector.load %arg8[%c0_6, %c0_7] : memref<32x16xf32, #tpu.memory_space<vmem>>, vector<32x16xf32>
    tpu.vector_store %arg8[%c0_6, %c0_7], %6 {strides = array<i32>} : memref<32x16xf32, #tpu.memory_space<vmem>>, vector<32x16xf32>,
    %c0_i32 = arith.constant 0 : i32
    %8 = arith.index_cast %c0_i32 : i32 to index
    %c0_8 = arith.constant 0 : index
    %c0_9 = arith.constant 0 : index
    %9 = vector.load %arg1[%8, %c0_8, %c0_9] : memref<4x32x16xf32, #tpu.memory_space<vmem>>, vector<1x32x16xf32>
    %10 = vector.shape_cast %9 : vector<1x32x16xf32> to vector<32x16xf32>
    %11 = arith.truncf %10 : vector<32x16xf32> to vector<32x16xbf16>
    %cst_10 = arith.constant dense<0.000000e+00> : vector<32x16xf32>
    %12 = tpu.matmul %0, %11, %cst_10 {dimension_numbers = #tpu.dot_dimension_numbers<[1], [0], [0], [1], [0, 0, 1, 1], [], []>} : vector<32x32xbf16>, vector<32x16xbf16>, vector<32x16xf32> -> vector<32x16xf32>
    %13 = arith.addf %12, %3 : vector<32x16xf32>
    %cst_11 = arith.constant 0.000000e+00 : f32
    %14 = vector.broadcast %cst_11 : f32 to vector<32x16xf32>
    %15 = arith.maximumf %13, %14 : vector<32x16xf32>
    %16 = arith.addf %10, %15 : vector<32x16xf32>
    %17 = arith.index_cast %c0_i32 : i32 to index
    %c0_12 = arith.constant 0 : index
    %c0_13 = arith.constant 0 : index
    %18 = vector.load %arg6[%17, %c0_12, %c0_13] : memref<4x32x16xf32, #tpu.memory_space<vmem>>, vector<1x32x16xf32>
    %19 = vector.shape_cast %18 : vector<1x32x16xf32> to vector<32x16xf32>
    %20 = vector.shape_cast %16 : vector<32x16xf32> to vector<1x32x16xf32>
    tpu.vector_store %arg6[%17, %c0_12, %c0_13], %20 {strides = array<i32>} : memref<4x32x16xf32, #tpu.memory_space<vmem>>, vector<1x32x16xf32>,
    %c0_14 = arith.constant 0 : index
    %c0_15 = arith.constant 0 : index
    %21 = vector.load %arg7[%c0_14, %c0_15] : memref<32x16xf32, #tpu.memory_space<vmem>>, vector<32x16xf32>
    %22 = arith.addf %21, %16 : vector<32x16xf32>
    %c0_16 = arith.constant 0 : index
    %c0_17 = arith.constant 0 : index
    %23 = vector.load %arg7[%c0_16, %c0_17] : memref<32x16xf32, #tpu.memory_space<vmem>>, vector<32x16xf32>
    tpu.vector_store %arg7[%c0_16, %c0_17], %22 {strides = array<i32>} : memref<32x16xf32, #tpu.memory_space<vmem>>, vector<32x16xf32>,
    %c0_18 = arith.constant 0 : index
    %c0_19 = arith.constant 0 : index
    %24 = vector.load %arg8[%c0_18, %c0_19] : memref<32x16xf32, #tpu.memory_space<vmem>>, vector<32x16xf32>
    %25 = arith.mulf %16, %16 : vector<32x16xf32>
    %26 = arith.addf %24, %25 : vector<32x16xf32>
    %c0_20 = arith.constant 0 : index
    %c0_21 = arith.constant 0 : index
    %27 = vector.load %arg8[%c0_20, %c0_21] : memref<32x16xf32, #tpu.memory_space<vmem>>, vector<32x16xf32>
    tpu.vector_store %arg8[%c0_20, %c0_21], %26 {strides = array<i32>} : memref<32x16xf32, #tpu.memory_space<vmem>>, vector<32x16xf32>,
    %c1_i32 = arith.constant 1 : i32
    %28 = arith.index_cast %c1_i32 : i32 to index
    %c0_22 = arith.constant 0 : index
    %c0_23 = arith.constant 0 : index
    %29 = vector.load %arg1[%28, %c0_22, %c0_23] : memref<4x32x16xf32, #tpu.memory_space<vmem>>, vector<1x32x16xf32>
    %30 = vector.shape_cast %29 : vector<1x32x16xf32> to vector<32x16xf32>
    %31 = arith.truncf %30 : vector<32x16xf32> to vector<32x16xbf16>
    %cst_24 = arith.constant dense<0.000000e+00> : vector<32x16xf32>
    %32 = tpu.matmul %0, %31, %cst_24 {dimension_numbers = #tpu.dot_dimension_numbers<[1], [0], [0], [1], [0, 0, 1, 1], [], []>} : vector<32x32xbf16>, vector<32x16xbf16>, vector<32x16xf32> -> vector<32x16xf32>
    %33 = arith.addf %32, %3 : vector<32x16xf32>
    %cst_25 = arith.constant 0.000000e+00 : f32
    %34 = vector.broadcast %cst_25 : f32 to vector<32x16xf32>
    %35 = arith.maximumf %33, %34 : vector<32x16xf32>
    %36 = arith.addf %30, %35 : vector<32x16xf32>
    %37 = arith.index_cast %c1_i32 : i32 to index
    %c0_26 = arith.constant 0 : index
    %c0_27 = arith.constant 0 : index
    %38 = vector.load %arg6[%37, %c0_26, %c0_27] : memref<4x32x16xf32, #tpu.memory_space<vmem>>, vector<1x32x16xf32>
    %39 = vector.shape_cast %38 : vector<1x32x16xf32> to vector<32x16xf32>
    %40 = vector.shape_cast %36 : vector<32x16xf32> to vector<1x32x16xf32>
    tpu.vector_store %arg6[%37, %c0_26, %c0_27], %40 {strides = array<i32>} : memref<4x32x16xf32, #tpu.memory_space<vmem>>, vector<1x32x16xf32>,
    %c0_28 = arith.constant 0 : index
    %c0_29 = arith.constant 0 : index
    %41 = vector.load %arg7[%c0_28, %c0_29] : memref<32x16xf32, #tpu.memory_space<vmem>>, vector<32x16xf32>
    %42 = arith.addf %41, %36 : vector<32x16xf32>
    %c0_30 = arith.constant 0 : index
    %c0_31 = arith.constant 0 : index
    %43 = vector.load %arg7[%c0_30, %c0_31] : memref<32x16xf32, #tpu.memory_space<vmem>>, vector<32x16xf32>
    tpu.vector_store %arg7[%c0_30, %c0_31], %42 {strides = array<i32>} : memref<32x16xf32, #tpu.memory_space<vmem>>, vector<32x16xf32>,
    %c0_32 = arith.constant 0 : index
    %c0_33 = arith.constant 0 : index
    %44 = vector.load %arg8[%c0_32, %c0_33] : memref<32x16xf32, #tpu.memory_space<vmem>>, vector<32x16xf32>
    %45 = arith.mulf %36, %36 : vector<32x16xf32>
    %46 = arith.addf %44, %45 : vector<32x16xf32>
    %c0_34 = arith.constant 0 : index
    %c0_35 = arith.constant 0 : index
    %47 = vector.load %arg8[%c0_34, %c0_35] : memref<32x16xf32, #tpu.memory_space<vmem>>, vector<32x16xf32>
    tpu.vector_store %arg8[%c0_34, %c0_35], %46 {strides = array<i32>} : memref<32x16xf32, #tpu.memory_space<vmem>>, vector<32x16xf32>,
    %c2_i32 = arith.constant 2 : i32
    %48 = arith.index_cast %c2_i32 : i32 to index
    %c0_36 = arith.constant 0 : index
    %c0_37 = arith.constant 0 : index
    %49 = vector.load %arg1[%48, %c0_36, %c0_37] : memref<4x32x16xf32, #tpu.memory_space<vmem>>, vector<1x32x16xf32>
    %50 = vector.shape_cast %49 : vector<1x32x16xf32> to vector<32x16xf32>
    %51 = arith.truncf %50 : vector<32x16xf32> to vector<32x16xbf16>
    %cst_38 = arith.constant dense<0.000000e+00> : vector<32x16xf32>
    %52 = tpu.matmul %0, %51, %cst_38 {dimension_numbers = #tpu.dot_dimension_numbers<[1], [0], [0], [1], [0, 0, 1, 1], [], []>} : vector<32x32xbf16>, vector<32x16xbf16>, vector<32x16xf32> -> vector<32x16xf32>
    %53 = arith.addf %52, %3 : vector<32x16xf32>
    %cst_39 = arith.constant 0.000000e+00 : f32
    %54 = vector.broadcast %cst_39 : f32 to vector<32x16xf32>
    %55 = arith.maximumf %53, %54 : vector<32x16xf32>
    %56 = arith.addf %50, %55 : vector<32x16xf32>
    %57 = arith.index_cast %c2_i32 : i32 to index
    %c0_40 = arith.constant 0 : index
    %c0_41 = arith.constant 0 : index
    %58 = vector.load %arg6[%57, %c0_40, %c0_41] : memref<4x32x16xf32, #tpu.memory_space<vmem>>, vector<1x32x16xf32>
    %59 = vector.shape_cast %58 : vector<1x32x16xf32> to vector<32x16xf32>
    %60 = vector.shape_cast %56 : vector<32x16xf32> to vector<1x32x16xf32>
    tpu.vector_store %arg6[%57, %c0_40, %c0_41], %60 {strides = array<i32>} : memref<4x32x16xf32, #tpu.memory_space<vmem>>, vector<1x32x16xf32>,
    %c0_42 = arith.constant 0 : index
    %c0_43 = arith.constant 0 : index
    %61 = vector.load %arg7[%c0_42, %c0_43] : memref<32x16xf32, #tpu.memory_space<vmem>>, vector<32x16xf32>
    %62 = arith.addf %61, %56 : vector<32x16xf32>
    %c0_44 = arith.constant 0 : index
    %c0_45 = arith.constant 0 : index
    %63 = vector.load %arg7[%c0_44, %c0_45] : memref<32x16xf32, #tpu.memory_space<vmem>>, vector<32x16xf32>
    tpu.vector_store %arg7[%c0_44, %c0_45], %62 {strides = array<i32>} : memref<32x16xf32, #tpu.memory_space<vmem>>, vector<32x16xf32>,
    %c0_46 = arith.constant 0 : index
    %c0_47 = arith.constant 0 : index
    %64 = vector.load %arg8[%c0_46, %c0_47] : memref<32x16xf32, #tpu.memory_space<vmem>>, vector<32x16xf32>
    %65 = arith.mulf %56, %56 : vector<32x16xf32>
    %66 = arith.addf %64, %65 : vector<32x16xf32>
    %c0_48 = arith.constant 0 : index
    %c0_49 = arith.constant 0 : index
    %67 = vector.load %arg8[%c0_48, %c0_49] : memref<32x16xf32, #tpu.memory_space<vmem>>, vector<32x16xf32>
    tpu.vector_store %arg8[%c0_48, %c0_49], %66 {strides = array<i32>} : memref<32x16xf32, #tpu.memory_space<vmem>>, vector<32x16xf32>,
    %c3_i32 = arith.constant 3 : i32
    %68 = arith.index_cast %c3_i32 : i32 to index
    %c0_50 = arith.constant 0 : index
    %c0_51 = arith.constant 0 : index
    %69 = vector.load %arg1[%68, %c0_50, %c0_51] : memref<4x32x16xf32, #tpu.memory_space<vmem>>, vector<1x32x16xf32>
    %70 = vector.shape_cast %69 : vector<1x32x16xf32> to vector<32x16xf32>
    %71 = arith.truncf %70 : vector<32x16xf32> to vector<32x16xbf16>
    %cst_52 = arith.constant dense<0.000000e+00> : vector<32x16xf32>
    %72 = tpu.matmul %0, %71, %cst_52 {dimension_numbers = #tpu.dot_dimension_numbers<[1], [0], [0], [1], [0, 0, 1, 1], [], []>} : vector<32x32xbf16>, vector<32x16xbf16>, vector<32x16xf32> -> vector<32x16xf32>
    %73 = arith.addf %72, %3 : vector<32x16xf32>
    %cst_53 = arith.constant 0.000000e+00 : f32
    %74 = vector.broadcast %cst_53 : f32 to vector<32x16xf32>
    %75 = arith.maximumf %73, %74 : vector<32x16xf32>
    %76 = arith.addf %70, %75 : vector<32x16xf32>
    %77 = arith.index_cast %c3_i32 : i32 to index
    %c0_54 = arith.constant 0 : index
    %c0_55 = arith.constant 0 : index
    %78 = vector.load %arg6[%77, %c0_54, %c0_55] : memref<4x32x16xf32, #tpu.memory_space<vmem>>, vector<1x32x16xf32>
    %79 = vector.shape_cast %78 : vector<1x32x16xf32> to vector<32x16xf32>
    %80 = vector.shape_cast %76 : vector<32x16xf32> to vector<1x32x16xf32>
    tpu.vector_store %arg6[%77, %c0_54, %c0_55], %80 {strides = array<i32>} : memref<4x32x16xf32, #tpu.memory_space<vmem>>, vector<1x32x16xf32>,
    %c0_56 = arith.constant 0 : index
    %c0_57 = arith.constant 0 : index
    %81 = vector.load %arg7[%c0_56, %c0_57] : memref<32x16xf32, #tpu.memory_space<vmem>>, vector<32x16xf32>
    %82 = arith.addf %81, %76 : vector<32x16xf32>
    %c0_58 = arith.constant 0 : index
    %c0_59 = arith.constant 0 : index
    %83 = vector.load %arg7[%c0_58, %c0_59] : memref<32x16xf32, #tpu.memory_space<vmem>>, vector<32x16xf32>
    tpu.vector_store %arg7[%c0_58, %c0_59], %82 {strides = array<i32>} : memref<32x16xf32, #tpu.memory_space<vmem>>, vector<32x16xf32>,
    %c0_60 = arith.constant 0 : index
    %c0_61 = arith.constant 0 : index
    %84 = vector.load %arg8[%c0_60, %c0_61] : memref<32x16xf32, #tpu.memory_space<vmem>>, vector<32x16xf32>
    %85 = arith.mulf %76, %76 : vector<32x16xf32>
    %86 = arith.addf %84, %85 : vector<32x16xf32>
    %c0_62 = arith.constant 0 : index
    %c0_63 = arith.constant 0 : index
    %87 = vector.load %arg8[%c0_62, %c0_63] : memref<32x16xf32, #tpu.memory_space<vmem>>, vector<32x16xf32>
    tpu.vector_store %arg8[%c0_62, %c0_63], %86 {strides = array<i32>} : memref<32x16xf32, #tpu.memory_space<vmem>>, vector<32x16xf32>,
    %c4_i32 = arith.constant 4 : i32
    %c0_64 = arith.constant 0 : index
    %c0_65 = arith.constant 0 : index
    %88 = vector.load %arg7[%c0_64, %c0_65] : memref<32x16xf32, #tpu.memory_space<vmem>>, vector<32x16xf32>
    %cst_66 = arith.constant 2.500000e-01 : f32
    %89 = vector.broadcast %cst_66 : f32 to vector<32x16xf32>
    %90 = arith.mulf %88, %89 : vector<32x16xf32>
    %c0_67 = arith.constant 0 : index
    %c0_68 = arith.constant 0 : index
    %91 = vector.load %arg8[%c0_67, %c0_68] : memref<32x16xf32, #tpu.memory_space<vmem>>, vector<32x16xf32>
    %cst_69 = arith.constant 2.500000e-01 : f32
    %92 = vector.broadcast %cst_69 : f32 to vector<32x16xf32>
    %93 = arith.mulf %91, %92 : vector<32x16xf32>
    %94 = arith.mulf %90, %90 : vector<32x16xf32>
    %95 = arith.subf %93, %94 : vector<32x16xf32>
    %cst_70 = arith.constant 0.000000e+00 : f32
    %96 = vector.broadcast %cst_70 : f32 to vector<32x16xf32>
    %97 = arith.maximumf %95, %96 : vector<32x16xf32>
    %c0_71 = arith.constant 0 : index
    %c0_72 = arith.constant 0 : index
    %98 = vector.load %arg4[%c0_71, %c0_72] : memref<32x16xf32, #tpu.memory_space<vmem>>, vector<32x16xf32>
    %cst_73 = arith.constant 9.99999974E-6 : f32
    %99 = vector.broadcast %cst_73 : f32 to vector<32x16xf32>
    %100 = arith.addf %97, %99 : vector<32x16xf32>
    %101 = math.rsqrt %100 : vector<32x16xf32>
    %102 = arith.mulf %98, %101 : vector<32x16xf32>
    %c0_74 = arith.constant 0 : index
    %c0_75 = arith.constant 0 : index
    %103 = vector.load %arg5[%c0_74, %c0_75] : memref<32x16xf32, #tpu.memory_space<vmem>>, vector<32x16xf32>
    %104 = arith.mulf %90, %102 : vector<32x16xf32>
    %105 = arith.subf %103, %104 : vector<32x16xf32>
    %c0_i32_76 = arith.constant 0 : i32
    %106 = arith.index_cast %c0_i32_76 : i32 to index
    %c0_77 = arith.constant 0 : index
    %c0_78 = arith.constant 0 : index
    %107 = vector.load %arg6[%106, %c0_77, %c0_78] : memref<4x32x16xf32, #tpu.memory_space<vmem>>, vector<1x32x16xf32>
    %108 = vector.shape_cast %107 : vector<1x32x16xf32> to vector<32x16xf32>
    %109 = arith.mulf %108, %102 : vector<32x16xf32>
    %110 = arith.addf %109, %105 : vector<32x16xf32>
    %111 = arith.index_cast %c0_i32_76 : i32 to index
    %c0_79 = arith.constant 0 : index
    %c0_80 = arith.constant 0 : index
    %112 = vector.load %arg6[%111, %c0_79, %c0_80] : memref<4x32x16xf32, #tpu.memory_space<vmem>>, vector<1x32x16xf32>
    %113 = vector.shape_cast %112 : vector<1x32x16xf32> to vector<32x16xf32>
    %114 = vector.shape_cast %110 : vector<32x16xf32> to vector<1x32x16xf32>
    tpu.vector_store %arg6[%111, %c0_79, %c0_80], %114 {strides = array<i32>} : memref<4x32x16xf32, #tpu.memory_space<vmem>>, vector<1x32x16xf32>,
    %c1_i32_81 = arith.constant 1 : i32
    %115 = arith.index_cast %c1_i32_81 : i32 to index
    %c0_82 = arith.constant 0 : index
    %c0_83 = arith.constant 0 : index
    %116 = vector.load %arg6[%115, %c0_82, %c0_83] : memref<4x32x16xf32, #tpu.memory_space<vmem>>, vector<1x32x16xf32>
    %117 = vector.shape_cast %116 : vector<1x32x16xf32> to vector<32x16xf32>
    %118 = arith.mulf %117, %102 : vector<32x16xf32>
    %119 = arith.addf %118, %105 : vector<32x16xf32>
    %120 = arith.index_cast %c1_i32_81 : i32 to index
    %c0_84 = arith.constant 0 : index
    %c0_85 = arith.constant 0 : index
    %121 = vector.load %arg6[%120, %c0_84, %c0_85] : memref<4x32x16xf32, #tpu.memory_space<vmem>>, vector<1x32x16xf32>
    %122 = vector.shape_cast %121 : vector<1x32x16xf32> to vector<32x16xf32>
    %123 = vector.shape_cast %119 : vector<32x16xf32> to vector<1x32x16xf32>
    tpu.vector_store %arg6[%120, %c0_84, %c0_85], %123 {strides = array<i32>} : memref<4x32x16xf32, #tpu.memory_space<vmem>>, vector<1x32x16xf32>,
    %c2_i32_86 = arith.constant 2 : i32
    %124 = arith.index_cast %c2_i32_86 : i32 to index
    %c0_87 = arith.constant 0 : index
    %c0_88 = arith.constant 0 : index
    %125 = vector.load %arg6[%124, %c0_87, %c0_88] : memref<4x32x16xf32, #tpu.memory_space<vmem>>, vector<1x32x16xf32>
    %126 = vector.shape_cast %125 : vector<1x32x16xf32> to vector<32x16xf32>
    %127 = arith.mulf %126, %102 : vector<32x16xf32>
    %128 = arith.addf %127, %105 : vector<32x16xf32>
    %129 = arith.index_cast %c2_i32_86 : i32 to index
    %c0_89 = arith.constant 0 : index
    %c0_90 = arith.constant 0 : index
    %130 = vector.load %arg6[%129, %c0_89, %c0_90] : memref<4x32x16xf32, #tpu.memory_space<vmem>>, vector<1x32x16xf32>
    %131 = vector.shape_cast %130 : vector<1x32x16xf32> to vector<32x16xf32>
    %132 = vector.shape_cast %128 : vector<32x16xf32> to vector<1x32x16xf32>
    tpu.vector_store %arg6[%129, %c0_89, %c0_90], %132 {strides = array<i32>} : memref<4x32x16xf32, #tpu.memory_space<vmem>>, vector<1x32x16xf32>,
    %c3_i32_91 = arith.constant 3 : i32
    %133 = arith.index_cast %c3_i32_91 : i32 to index
    %c0_92 = arith.constant 0 : index
    %c0_93 = arith.constant 0 : index
    %134 = vector.load %arg6[%133, %c0_92, %c0_93] : memref<4x32x16xf32, #tpu.memory_space<vmem>>, vector<1x32x16xf32>
    %135 = vector.shape_cast %134 : vector<1x32x16xf32> to vector<32x16xf32>
    %136 = arith.mulf %135, %102 : vector<32x16xf32>
    %137 = arith.addf %136, %105 : vector<32x16xf32>
    %138 = arith.index_cast %c3_i32_91 : i32 to index
    %c0_94 = arith.constant 0 : index
    %c0_95 = arith.constant 0 : index
    %139 = vector.load %arg6[%138, %c0_94, %c0_95] : memref<4x32x16xf32, #tpu.memory_space<vmem>>, vector<1x32x16xf32>
    %140 = vector.shape_cast %139 : vector<1x32x16xf32> to vector<32x16xf32>
    %141 = vector.shape_cast %137 : vector<32x16xf32> to vector<1x32x16xf32>
    tpu.vector_store %arg6[%138, %c0_94, %c0_95], %141 {strides = array<i32>} : memref<4x32x16xf32, #tpu.memory_space<vmem>>, vector<1x32x16xf32>,
    %c4_i32_96 = arith.constant 4 : i32
    return
  }
  func.func @transform_0(%arg0: i32) -> (i32, i32, i32) {
    %c0_i32 = arith.constant 0 : i32
    %c0_i32_0 = arith.constant 0 : i32
    %c0_i32_1 = arith.constant 0 : i32
    return %c0_i32, %c0_i32_0, %arg0 : i32, i32, i32
  }
  func.func @transform_1(%arg0: i32) -> (i32, i32) {
    %c0_i32 = arith.constant 0 : i32
    %c0_i32_0 = arith.constant 0 : i32
    %c0_i32_1 = arith.constant 0 : i32
    return %c0_i32, %c0_i32_0 : i32, i32
  }
  func.func @transform_2(%arg0: i32) -> (i32, i32) {
    %c0_i32 = arith.constant 0 : i32
    %c0_i32_0 = arith.constant 0 : i32
    %c0_i32_1 = arith.constant 0 : i32
    return %c0_i32, %c0_i32_0 : i32, i32
  }
  func.func @transform_3(%arg0: i32) -> (i32, i32) {
    %c0_i32 = arith.constant 0 : i32
    %c0_i32_0 = arith.constant 0 : i32
    return %c0_i32, %arg0 : i32, i32
  }
  func.func @transform_4(%arg0: i32) -> (i32, i32) {
    %c0_i32 = arith.constant 0 : i32
    %c0_i32_0 = arith.constant 0 : i32
    return %c0_i32, %arg0 : i32, i32
  }
  func.func @transform_5(%arg0: i32) -> (i32, i32, i32) {
    %c0_i32 = arith.constant 0 : i32
    %c0_i32_0 = arith.constant 0 : i32
    %c0_i32_1 = arith.constant 0 : i32
    return %c0_i32, %c0_i32_0, %arg0 : i32, i32, i32
  }
}

</mosaic_0001>

<llo_original>
// kernel: tpu_custom_call.1
$region0: #{tpu_custom_call.1}
  #allocation0 [shape = 'u32[]', space=smem, size = 0x4, offset = 0x4, fixed_abs, tag = 'smem constant byte address 0x4 - core index']
  #allocation1 [shape = 'u32[144,128]{1,0:T(1,128)}', space=vmem, size = 0x12000, scoped, tag = 'internal scratch']
  #allocation2 [shape = 'f32[32,16]{1,0:T(8,128)}', space=vmem, size = 0x4000, scoped, tag = 'scratch operand']
  #allocation3 [shape = 'f32[32,16]{1,0:T(8,128)}', space=vmem, size = 0x4000, scoped, tag = 'scratch operand']
  %s0 = inlined_call_operand.vmem [shape: f32[4,32,16], index: 0, kind: input, shape index: {}]
  %s1 = inlined_call_operand.vmem [shape: bf16[32,32], index: 1, kind: input, shape index: {}]
  %s2 = inlined_call_operand.vmem [shape: f32[32,1], index: 2, kind: input, shape index: {}]
  %s3 = inlined_call_operand.vmem [shape: f32[32,16], index: 3, kind: input, shape index: {}]
  %s4 = inlined_call_operand.vmem [shape: f32[32,16], index: 4, kind: input, shape index: {}]
  %s5 = inlined_call_operand.vmem [shape: f32[4,32,16], index: 5, kind: output, shape index: {}]
  %s6 = sld [smem:[#allocation0]]
  $region30: #{tpu_custom_call.1} parent=0
    _
  %s8 = ssub.s32 1, %s6
  %s9 = scalar_select 0, %s8, %s6
  // Predicated region
  $region2: #{tpu_custom_call.1} parent=0 // pred_check
    _
  $region3: #{tpu_custom_call.1} parent=0 // pred_check_branch
    %11 = sbr.rel (0) target = $region5
  $region4: #{tpu_custom_call.1} parent=0 // pred_region
    _
  $region5: #{tpu_custom_call.1} parent=0 // pred_fallthru
    _
  // Predicated region
  $region6: #{tpu_custom_call.1} parent=0 // pred_check
    _
  $region7: #{tpu_custom_call.1} parent=0 // pred_check_branch
    %13 = sbr.rel (0) target = $region9
  $region8: #{tpu_custom_call.1} parent=0 // pred_region
    _
  $region9: #{tpu_custom_call.1} parent=0 // pred_fallthru
    _
  // Predicated region
  $region10: #{tpu_custom_call.1} parent=0 // pred_check
    _
  $region11: #{tpu_custom_call.1} parent=0 // pred_check_branch
    %15 = sbr.rel (0) target = $region13
  $region12: #{tpu_custom_call.1} parent=0 // pred_region
    _
  $region13: #{tpu_custom_call.1} parent=0 // pred_fallthru
    _
  // Predicated region
  $region14: #{tpu_custom_call.1} parent=0 // pred_check
    _
  $region15: #{tpu_custom_call.1} parent=0 // pred_check_branch
    %17 = sbr.rel (0) target = $region17
  $region16: #{tpu_custom_call.1} parent=0 // pred_region
    _
  $region17: #{tpu_custom_call.1} parent=0 // pred_fallthru
    _
  // Predicated region
  $region18: #{tpu_custom_call.1} parent=0 // pred_check
    _
  $region19: #{tpu_custom_call.1} parent=0 // pred_check_branch
    %19 = sbr.rel (0) target = $region21
  $region20: #{tpu_custom_call.1} parent=0 // pred_region
    _
  $region21: #{tpu_custom_call.1} parent=0 // pred_fallthru
    _
  %v21 = vld [vmem:[%s1] sm:$0xf]
  %v22 = vld [vmem:[%s1 + $0x4] sm:$0xf]
  %v23 = vld [vmem:[%s1 + $0x8] sm:$0xf]
  %v24 = vld [vmem:[%s1 + $0xc] sm:$0xf]
  %v25 = vld [vmem:[%s2] sm:$0xff]
  %v26 = vld [vmem:[%s2 + $0x8] sm:$0xff]
  %v27 = vld [vmem:[%s2 + $0x10] sm:$0xff]
  %v28 = vld [vmem:[%s2 + $0x18] sm:$0xff]
  %30 = vset.pattern.permute.xlu0 0
  %31 = vperm.xlu0 %30, %v25
  %v32 = vpop.permute.xlu0 %31
  %35 = vset.pattern.permute.xlu0 0
  %36 = vperm.xlu0 %35, %v26
  %v37 = vpop.permute.xlu0 %36
  %40 = vset.pattern.permute.xlu0 0
  %41 = vperm.xlu0 %40, %v27
  %v42 = vpop.permute.xlu0 %41
  %45 = vset.pattern.permute.xlu0 0
  %46 = vperm.xlu0 %45, %v28
  %v47 = vpop.permute.xlu0 %46
  %vm49 = vcmask 130048
  %50 = vst.msk [vmem:[#allocation2] sm:$0xff] %vm49, 0.0
  %51 = vst.msk [vmem:[#allocation2 + $0x8] sm:$0xff] %vm49, 0.0
  %52 = vst.msk [vmem:[#allocation2 + $0x10] sm:$0xff] %vm49, 0.0
  %53 = vst.msk [vmem:[#allocation2 + $0x18] sm:$0xff] %vm49, 0.0
  %54 = vst.msk [vmem:[#allocation3] sm:$0xff] %vm49, 0.0
  %55 = vst.msk [vmem:[#allocation3 + $0x8] sm:$0xff] %vm49, 0.0
  %56 = vst.msk [vmem:[#allocation3 + $0x10] sm:$0xff] %vm49, 0.0
  %57 = vst.msk [vmem:[#allocation3 + $0x18] sm:$0xff] %vm49, 0.0
  %v58 = vld [vmem:[%s0] sm:$0xff]
  %v59 = vld [vmem:[%s0 + $0x8] sm:$0xff]
  %v60 = vld [vmem:[%s0 + $0x10] sm:$0xff]
  %v61 = vld [vmem:[%s0 + $0x18] sm:$0xff]
  %v62 = vpack.c.bf16 %v59, %v58
  %v63 = vpack.c.bf16 %v61, %v60
  %v68 = vunpack.c.l.b16 %v21
  %v69 = vunpack.c.l.b16 %v22
  %v70 = vunpack.c.l.b16 %v23
  %v71 = vunpack.c.l.b16 %v24
  %v72 = vpack.c.b16 %v69, %v68
  %v73 = vpack.c.b16 %v71, %v70
  %vm74 = vcmask 261120
  %v76 = vsel %vm74, %v72, 0
  %v79 = vsel %vm74, %v73, 0
  %81 = vmatprep.subr.bf16.mxu0 0
  %82 = vmatpush1.bf16.msra.mxu0 %v62
  %83 = vmatprep.subr.bf16.mxu0 0
  %84 = vmatpush1.bf16.msra.mxu0 %v63
  %85 = vmatprep.subr.bf16.mxu0 0
  %86 = vmatpush1.bf16.msra.mxu0 0
  %87 = vmatprep.subr.bf16.mxu0 0
  %88 = vmatpush1.bf16.msra.mxu0 0
  %89 = vmatprep.subr.bf16.mxu0 0
  %90 = vmatpush1.bf16.msra.mxu0 0
  %91 = vmatprep.subr.bf16.mxu0 0
  %92 = vmatpush1.bf16.msra.mxu0 0
  %93 = vmatprep.subr.bf16.mxu0 0
  %94 = vmatpush1.bf16.msra.mxu0 0
  %95 = vmatprep.subr.bf16.mxu0 0
  %96 = vmatpush1.bf16.msra.mxu0 0
  %97 = vmatprep.subr.bf16.mxu0 0
  %98 = vmatpush1.bf16.msra.mxu0 0
  %99 = vmatprep.subr.bf16.mxu0 0
  %100 = vmatpush1.bf16.msra.mxu0 0
  %101 = vmatprep.subr.bf16.mxu0 0
  %102 = vmatpush1.bf16.msra.mxu0 0
  %103 = vmatprep.subr.bf16.mxu0 0
  %104 = vmatpush1.bf16.msra.mxu0 0
  %105 = vmatprep.subr.bf16.mxu0 0
  %106 = vmatpush1.bf16.msra.mxu0 0
  %107 = vmatprep.subr.bf16.mxu0 0
  %108 = vmatpush1.bf16.msra.mxu0 0
  %109 = vmatprep.subr.bf16.mxu0 0
  %110 = vmatpush1.bf16.msra.mxu0 0
  %111 = vmatprep.subr.bf16.mxu0 0
  %112 = vmatpush1.bf16.msra.mxu0 0
  %113 = vmatprep.mubr.bf16.mxu0 0
  %114 = vmatmul.mubr.bf16.gmra.mrb[0].mxu0 %v76
  %v115 = vpop.f32.mrb[0].mxu0
  %v116 = vadd.f32 %v32, %v115
  %v117 = vpop.f32.mrb[0].mxu0
  %v118 = vpop.f32.mrb[0].mxu0
  %v119 = vadd.f32 %v37, %v118
  %v120 = vpop.f32.mrb[0].mxu0
  %121 = vmatprep.mubr.bf16.mxu0 0
  %122 = vmatmul.mubr.bf16.gmra.mrb[0].mxu0 %v79
  %v123 = vpop.f32.mrb[0].mxu0
  %v124 = vadd.f32 %v42, %v123
  %v125 = vpop.f32.mrb[0].mxu0
  %v126 = vpop.f32.mrb[0].mxu0
  %v127 = vadd.f32 %v47, %v126
  %v128 = vpop.f32.mrb[0].mxu0
  %129 = vdwg.mxu0
  %v130 = vmax.f32 %v116, 0.0
  %v131 = vmax.f32 %v119, 0.0
  %v132 = vmax.f32 %v124, 0.0
  %v133 = vmax.f32 %v127, 0.0
  %v134 = vadd.f32 %v58, %v130
  %v135 = vadd.f32 %v59, %v131
  %v136 = vadd.f32 %v60, %v132
  %v137 = vadd.f32 %v61, %v133
  %138 = vst.msk [vmem:[%s5] sm:$0xff] %vm49, %v134
  %139 = vst.msk [vmem:[%s5 + $0x8] sm:$0xff] %vm49, %v135
  %140 = vst.msk [vmem:[%s5 + $0x10] sm:$0xff] %vm49, %v136
  %141 = vst.msk [vmem:[%s5 + $0x18] sm:$0xff] %vm49, %v137
  %v142 = vld [vmem:[#allocation2] sm:$0xff]
  %v143 = vld [vmem:[#allocation2 + $0x8] sm:$0xff]
  %v144 = vld [vmem:[#allocation2 + $0x10] sm:$0xff]
  %v145 = vld [vmem:[#allocation2 + $0x18] sm:$0xff]
  %v146 = vadd.f32 %v142, %v134
  %v147 = vadd.f32 %v143, %v135
  %v148 = vadd.f32 %v144, %v136
  %v149 = vadd.f32 %v145, %v137
  %150 = vst.msk [vmem:[#allocation2] sm:$0xff] %vm49, %v146
  %151 = vst.msk [vmem:[#allocation2 + $0x8] sm:$0xff] %vm49, %v147
  %152 = vst.msk [vmem:[#allocation2 + $0x10] sm:$0xff] %vm49, %v148
  %153 = vst.msk [vmem:[#allocation2 + $0x18] sm:$0xff] %vm49, %v149
  %v154 = vld [vmem:[#allocation3] sm:$0xff]
  %v155 = vld [vmem:[#allocation3 + $0x8] sm:$0xff]
  %v156 = vld [vmem:[#allocation3 + $0x10] sm:$0xff]
  %v157 = vld [vmem:[#allocation3 + $0x18] sm:$0xff]
  %v158 = vmul.f32 %v134, %v134
  %v159 = vmul.f32 %v135, %v135
  %v160 = vmul.f32 %v136, %v136
  %v161 = vmul.f32 %v137, %v137
  %v162 = vadd.f32 %v154, %v158
  %v163 = vadd.f32 %v155, %v159
  %v164 = vadd.f32 %v156, %v160
  %v165 = vadd.f32 %v157, %v161
  %166 = vst.msk [vmem:[#allocation3] sm:$0xff] %vm49, %v162
  %167 = vst.msk [vmem:[#allocation3 + $0x8] sm:$0xff] %vm49, %v163
  %168 = vst.msk [vmem:[#allocation3 + $0x10] sm:$0xff] %vm49, %v164
  %169 = vst.msk [vmem:[#allocation3 + $0x18] sm:$0xff] %vm49, %v165
  %s170 = scalar_lea.vmem %s0, 32
  %v171 = vld [vmem:[%s170] sm:$0xff]
  %v172 = vld [vmem:[%s170 + $0x8] sm:$0xff]
  %v173 = vld [vmem:[%s170 + $0x10] sm:$0xff]
  %v174 = vld [vmem:[%s170 + $0x18] sm:$0xff]
  %v175 = vpack.c.bf16 %v172, %v171
  %v176 = vpack.c.bf16 %v174, %v173
  %177 = vmatprep.subr.bf16.mxu0 0
  %178 = vmatpush1.bf16.msra.mxu0 %v175
  %179 = vmatprep.subr.bf16.mxu0 0
  %180 = vmatpush1.bf16.msra.mxu0 %v176
  %181 = vmatprep.subr.bf16.mxu0 0
  %182 = vmatpush1.bf16.msra.mxu0 0
  %183 = vmatprep.subr.bf16.mxu0 0
  %184 = vmatpush1.bf16.msra.mxu0 0
  %185 = vmatprep.subr.bf16.mxu0 0
  %186 = vmatpush1.bf16.msra.mxu0 0
  %187 = vmatprep.subr.bf16.mxu0 0
  %188 = vmatpush1.bf16.msra.mxu0 0
  %189 = vmatprep.subr.bf16.mxu0 0
  %190 = vmatpush1.bf16.msra.mxu0 0
  %191 = vmatprep.subr.bf16.mxu0 0
  %192 = vmatpush1.bf16.msra.mxu0 0
  %193 = vmatprep.subr.bf16.mxu0 0
  %194 = vmatpush1.bf16.msra.mxu0 0
  %195 = vmatprep.subr.bf16.mxu0 0
  %196 = vmatpush1.bf16.msra.mxu0 0
  %197 = vmatprep.subr.bf16.mxu0 0
  %198 = vmatpush1.bf16.msra.mxu0 0
  %199 = vmatprep.subr.bf16.mxu0 0
  %200 = vmatpush1.bf16.msra.mxu0 0
  %201 = vmatprep.subr.bf16.mxu0 0
  %202 = vmatpush1.bf16.msra.mxu0 0
  %203 = vmatprep.subr.bf16.mxu0 0
  %204 = vmatpush1.bf16.msra.mxu0 0
  %205 = vmatprep.subr.bf16.mxu0 0
  %206 = vmatpush1.bf16.msra.mxu0 0
  %207 = vmatprep.subr.bf16.mxu0 0
  %208 = vmatpush1.bf16.msra.mxu0 0
  %209 = vmatprep.mubr.bf16.mxu0 0
  %210 = vmatmul.mubr.bf16.gmra.mrb[0].mxu0 %v76
  %v211 = vpop.f32.mrb[0].mxu0
  %v212 = vadd.f32 %v32, %v211
  %v213 = vpop.f32.mrb[0].mxu0
  %v214 = vpop.f32.mrb[0].mxu0
  %v215 = vadd.f32 %v37, %v214
  %v216 = vpop.f32.mrb[0].mxu0
  %217 = vmatprep.mubr.bf16.mxu0 0
  %218 = vmatmul.mubr.bf16.gmra.mrb[0].mxu0 %v79
  %v219 = vpop.f32.mrb[0].mxu0
  %v220 = vadd.f32 %v42, %v219
  %v221 = vpop.f32.mrb[0].mxu0
  %v222 = vpop.f32.mrb[0].mxu0
  %v223 = vadd.f32 %v47, %v222
  %v224 = vpop.f32.mrb[0].mxu0
  %225 = vdwg.mxu0
  %v226 = vmax.f32 %v212, 0.0
  %v227 = vmax.f32 %v215, 0.0
  %v228 = vmax.f32 %v220, 0.0
  %v229 = vmax.f32 %v223, 0.0
  %v230 = vadd.f32 %v171, %v226
  %v231 = vadd.f32 %v172, %v227
  %v232 = vadd.f32 %v173, %v228
  %v233 = vadd.f32 %v174, %v229
  %s234 = scalar_lea.vmem %s5, 32
  %235 = vst.msk [vmem:[%s234] sm:$0xff] %vm49, %v230
  %236 = vst.msk [vmem:[%s234 + $0x8] sm:$0xff] %vm49, %v231
  %237 = vst.msk [vmem:[%s234 + $0x10] sm:$0xff] %vm49, %v232
  %238 = vst.msk [vmem:[%s234 + $0x18] sm:$0xff] %vm49, %v233
  %v239 = vld [vmem:[#allocation2] sm:$0xff]
  %v240 = vld [vmem:[#allocation2 + $0x8] sm:$0xff]
  %v241 = vld [vmem:[#allocation2 + $0x10] sm:$0xff]
  %v242 = vld [vmem:[#allocation2 + $0x18] sm:$0xff]
  %v243 = vadd.f32 %v239, %v230
  %v244 = vadd.f32 %v240, %v231
  %v245 = vadd.f32 %v241, %v232
  %v246 = vadd.f32 %v242, %v233
  %247 = vst.msk [vmem:[#allocation2] sm:$0xff] %vm49, %v243
  %248 = vst.msk [vmem:[#allocation2 + $0x8] sm:$0xff] %vm49, %v244
  %249 = vst.msk [vmem:[#allocation2 + $0x10] sm:$0xff] %vm49, %v245
  %250 = vst.msk [vmem:[#allocation2 + $0x18] sm:$0xff] %vm49, %v246
  %v251 = vld [vmem:[#allocation3] sm:$0xff]
  %v252 = vld [vmem:[#allocation3 + $0x8] sm:$0xff]
  %v253 = vld [vmem:[#allocation3 + $0x10] sm:$0xff]
  %v254 = vld [vmem:[#allocation3 + $0x18] sm:$0xff]
  %v255 = vmul.f32 %v230, %v230
  %v256 = vmul.f32 %v231, %v231
  %v257 = vmul.f32 %v232, %v232
  %v258 = vmul.f32 %v233, %v233
  %v259 = vadd.f32 %v251, %v255
  %v260 = vadd.f32 %v252, %v256
  %v261 = vadd.f32 %v253, %v257
  %v262 = vadd.f32 %v254, %v258
  %263 = vst.msk [vmem:[#allocation3] sm:$0xff] %vm49, %v259
  %264 = vst.msk [vmem:[#allocation3 + $0x8] sm:$0xff] %vm49, %v260
  %265 = vst.msk [vmem:[#allocation3 + $0x10] sm:$0xff] %vm49, %v261
  %266 = vst.msk [vmem:[#allocation3 + $0x18] sm:$0xff] %vm49, %v262
  %s267 = scalar_lea.vmem %s0, 64
  %v268 = vld [vmem:[%s267] sm:$0xff]
  %v269 = vld [vmem:[%s267 + $0x8] sm:$0xff]
  %v270 = vld [vmem:[%s267 + $0x10] sm:$0xff]
  %v271 = vld [vmem:[%s267 + $0x18] sm:$0xff]
  %v272 = vpack.c.bf16 %v269, %v268
  %v273 = vpack.c.bf16 %v271, %v270
  %274 = vmatprep.subr.bf16.mxu0 0
  %275 = vmatpush1.bf16.msra.mxu0 %v272
  %276 = vmatprep.subr.bf16.mxu0 0
  %277 = vmatpush1.bf16.msra.mxu0 %v273
  %278 = vmatprep.subr.bf16.mxu0 0
  %279 = vmatpush1.bf16.msra.mxu0 0
  %280 = vmatprep.subr.bf16.mxu0 0
  %281 = vmatpush1.bf16.msra.mxu0 0
  %282 = vmatprep.subr.bf16.mxu0 0
  %283 = vmatpush1.bf16.msra.mxu0 0
  %284 = vmatprep.subr.bf16.mxu0 0
  %285 = vmatpush1.bf16.msra.mxu0 0
  %286 = vmatprep.subr.bf16.mxu0 0
  %287 = vmatpush1.bf16.msra.mxu0 0
  %288 = vmatprep.subr.bf16.mxu0 0
  %289 = vmatpush1.bf16.msra.mxu0 0
  %290 = vmatprep.subr.bf16.mxu0 0
  %291 = vmatpush1.bf16.msra.mxu0 0
  %292 = vmatprep.subr.bf16.mxu0 0
  %293 = vmatpush1.bf16.msra.mxu0 0
  %294 = vmatprep.subr.bf16.mxu0 0
  %295 = vmatpush1.bf16.msra.mxu0 0
  %296 = vmatprep.subr.bf16.mxu0 0
  %297 = vmatpush1.bf16.msra.mxu0 0
  %298 = vmatprep.subr.bf16.mxu0 0
  %299 = vmatpush1.bf16.msra.mxu0 0
  %300 = vmatprep.subr.bf16.mxu0 0
  %301 = vmatpush1.bf16.msra.mxu0 0
  %302 = vmatprep.subr.bf16.mxu0 0
  %303 = vmatpush1.bf16.msra.mxu0 0
  %304 = vmatprep.subr.bf16.mxu0 0
  %305 = vmatpush1.bf16.msra.mxu0 0
  %306 = vmatprep.mubr.bf16.mxu0 0
  %307 = vmatmul.mubr.bf16.gmra.mrb[0].mxu0 %v76
  %v308 = vpop.f32.mrb[0].mxu0
  %v309 = vadd.f32 %v32, %v308
  %v310 = vpop.f32.mrb[0].mxu0
  %v311 = vpop.f32.mrb[0].mxu0
  %v312 = vadd.f32 %v37, %v311
  %v313 = vpop.f32.mrb[0].mxu0
  %314 = vmatprep.mubr.bf16.mxu0 0
  %315 = vmatmul.mubr.bf16.gmra.mrb[0].mxu0 %v79
  %v316 = vpop.f32.mrb[0].mxu0
  %v317 = vadd.f32 %v42, %v316
  %v318 = vpop.f32.mrb[0].mxu0
  %v319 = vpop.f32.mrb[0].mxu0
  %v320 = vadd.f32 %v47, %v319
  %v321 = vpop.f32.mrb[0].mxu0
  %322 = vdwg.mxu0
  %v323 = vmax.f32 %v309, 0.0
  %v324 = vmax.f32 %v312, 0.0
  %v325 = vmax.f32 %v317, 0.0
  %v326 = vmax.f32 %v320, 0.0
  %v327 = vadd.f32 %v268, %v323
  %v328 = vadd.f32 %v269, %v324
  %v329 = vadd.f32 %v270, %v325
  %v330 = vadd.f32 %v271, %v326
  %s331 = scalar_lea.vmem %s5, 64
  %332 = vst.msk [vmem:[%s331] sm:$0xff] %vm49, %v327
  %333 = vst.msk [vmem:[%s331 + $0x8] sm:$0xff] %vm49, %v328
  %334 = vst.msk [vmem:[%s331 + $0x10] sm:$0xff] %vm49, %v329
  %335 = vst.msk [vmem:[%s331 + $0x18] sm:$0xff] %vm49, %v330
  %v336 = vld [vmem:[#allocation2] sm:$0xff]
  %v337 = vld [vmem:[#allocation2 + $0x8] sm:$0xff]
  %v338 = vld [vmem:[#allocation2 + $0x10] sm:$0xff]
  %v339 = vld [vmem:[#allocation2 + $0x18] sm:$0xff]
  %v340 = vadd.f32 %v336, %v327
  %v341 = vadd.f32 %v337, %v328
  %v342 = vadd.f32 %v338, %v329
  %v343 = vadd.f32 %v339, %v330
  %344 = vst.msk [vmem:[#allocation2] sm:$0xff] %vm49, %v340
  %345 = vst.msk [vmem:[#allocation2 + $0x8] sm:$0xff] %vm49, %v341
  %346 = vst.msk [vmem:[#allocation2 + $0x10] sm:$0xff] %vm49, %v342
  %347 = vst.msk [vmem:[#allocation2 + $0x18] sm:$0xff] %vm49, %v343
  %v348 = vld [vmem:[#allocation3] sm:$0xff]
  %v349 = vld [vmem:[#allocation3 + $0x8] sm:$0xff]
  %v350 = vld [vmem:[#allocation3 + $0x10] sm:$0xff]
  %v351 = vld [vmem:[#allocation3 + $0x18] sm:$0xff]
  %v352 = vmul.f32 %v327, %v327
  %v353 = vmul.f32 %v328, %v328
  %v354 = vmul.f32 %v329, %v329
  %v355 = vmul.f32 %v330, %v330
  %v356 = vadd.f32 %v348, %v352
  %v357 = vadd.f32 %v349, %v353
  %v358 = vadd.f32 %v350, %v354
  %v359 = vadd.f32 %v351, %v355
  %360 = vst.msk [vmem:[#allocation3] sm:$0xff] %vm49, %v356
  %361 = vst.msk [vmem:[#allocation3 + $0x8] sm:$0xff] %vm49, %v357
  %362 = vst.msk [vmem:[#allocation3 + $0x10] sm:$0xff] %vm49, %v358
  %363 = vst.msk [vmem:[#allocation3 + $0x18] sm:$0xff] %vm49, %v359
  %s364 = scalar_lea.vmem %s0, 96
  %v365 = vld [vmem:[%s364] sm:$0xff]
  %v366 = vld [vmem:[%s364 + $0x8] sm:$0xff]
  %v367 = vld [vmem:[%s364 + $0x10] sm:$0xff]
  %v368 = vld [vmem:[%s364 + $0x18] sm:$0xff]
  %v369 = vpack.c.bf16 %v366, %v365
  %v370 = vpack.c.bf16 %v368, %v367
  %371 = vmatprep.subr.bf16.mxu0 0
  %372 = vmatpush1.bf16.msra.mxu0 %v369
  %373 = vmatprep.subr.bf16.mxu0 0
  %374 = vmatpush1.bf16.msra.mxu0 %v370
  %375 = vmatprep.subr.bf16.mxu0 0
  %376 = vmatpush1.bf16.msra.mxu0 0
  %377 = vmatprep.subr.bf16.mxu0 0
  %378 = vmatpush1.bf16.msra.mxu0 0
  %379 = vmatprep.subr.bf16.mxu0 0
  %380 = vmatpush1.bf16.msra.mxu0 0
  %381 = vmatprep.subr.bf16.mxu0 0
  %382 = vmatpush1.bf16.msra.mxu0 0
  %383 = vmatprep.subr.bf16.mxu0 0
  %384 = vmatpush1.bf16.msra.mxu0 0
  %385 = vmatprep.subr.bf16.mxu0 0
  %386 = vmatpush1.bf16.msra.mxu0 0
  %387 = vmatprep.subr.bf16.mxu0 0
  %388 = vmatpush1.bf16.msra.mxu0 0
  %389 = vmatprep.subr.bf16.mxu0 0
  %390 = vmatpush1.bf16.msra.mxu0 0
  %391 = vmatprep.subr.bf16.mxu0 0
  %392 = vmatpush1.bf16.msra.mxu0 0
  %393 = vmatprep.subr.bf16.mxu0 0
  %394 = vmatpush1.bf16.msra.mxu0 0
  %395 = vmatprep.subr.bf16.mxu0 0
  %396 = vmatpush1.bf16.msra.mxu0 0
  %397 = vmatprep.subr.bf16.mxu0 0
  %398 = vmatpush1.bf16.msra.mxu0 0
  %399 = vmatprep.subr.bf16.mxu0 0
  %400 = vmatpush1.bf16.msra.mxu0 0
  %401 = vmatprep.subr.bf16.mxu0 0
  %402 = vmatpush1.bf16.msra.mxu0 0
  %403 = vmatprep.mubr.bf16.mxu0 0
  %404 = vmatmul.mubr.bf16.gmra.mrb[0].mxu0 %v76
  %v405 = vpop.f32.mrb[0].mxu0
  %v406 = vadd.f32 %v32, %v405
  %v407 = vpop.f32.mrb[0].mxu0
  %v408 = vpop.f32.mrb[0].mxu0
  %v409 = vadd.f32 %v37, %v408
  %v410 = vpop.f32.mrb[0].mxu0
  %411 = vmatprep.mubr.bf16.mxu0 0
  %412 = vmatmul.mubr.bf16.gmra.mrb[0].mxu0 %v79
  %v413 = vpop.f32.mrb[0].mxu0
  %v414 = vadd.f32 %v42, %v413
  %v415 = vpop.f32.mrb[0].mxu0
  %v416 = vpop.f32.mrb[0].mxu0
  %v417 = vadd.f32 %v47, %v416
  %v418 = vpop.f32.mrb[0].mxu0
  %419 = vdwg.mxu0
  %v420 = vmax.f32 %v406, 0.0
  %v421 = vmax.f32 %v409, 0.0
  %v422 = vmax.f32 %v414, 0.0
  %v423 = vmax.f32 %v417, 0.0
  %v424 = vadd.f32 %v365, %v420
  %v425 = vadd.f32 %v366, %v421
  %v426 = vadd.f32 %v367, %v422
  %v427 = vadd.f32 %v368, %v423
  %s428 = scalar_lea.vmem %s5, 96
  %429 = vst.msk [vmem:[%s428] sm:$0xff] %vm49, %v424
  %430 = vst.msk [vmem:[%s428 + $0x8] sm:$0xff] %vm49, %v425
  %431 = vst.msk [vmem:[%s428 + $0x10] sm:$0xff] %vm49, %v426
  %432 = vst.msk [vmem:[%s428 + $0x18] sm:$0xff] %vm49, %v427
  %v433 = vld [vmem:[#allocation2] sm:$0xff]
  %v434 = vld [vmem:[#allocation2 + $0x8] sm:$0xff]
  %v435 = vld [vmem:[#allocation2 + $0x10] sm:$0xff]
  %v436 = vld [vmem:[#allocation2 + $0x18] sm:$0xff]
  %v437 = vadd.f32 %v433, %v424
  %v438 = vadd.f32 %v434, %v425
  %v439 = vadd.f32 %v435, %v426
  %v440 = vadd.f32 %v436, %v427
  %441 = vst.msk [vmem:[#allocation2] sm:$0xff] %vm49, %v437
  %442 = vst.msk [vmem:[#allocation2 + $0x8] sm:$0xff] %vm49, %v438
  %443 = vst.msk [vmem:[#allocation2 + $0x10] sm:$0xff] %vm49, %v439
  %444 = vst.msk [vmem:[#allocation2 + $0x18] sm:$0xff] %vm49, %v440
  %v445 = vld [vmem:[#allocation3] sm:$0xff]
  %v446 = vld [vmem:[#allocation3 + $0x8] sm:$0xff]
  %v447 = vld [vmem:[#allocation3 + $0x10] sm:$0xff]
  %v448 = vld [vmem:[#allocation3 + $0x18] sm:$0xff]
  %v449 = vmul.f32 %v424, %v424
  %v450 = vmul.f32 %v425, %v425
  %v451 = vmul.f32 %v426, %v426
  %v452 = vmul.f32 %v427, %v427
  %v453 = vadd.f32 %v445, %v449
  %v454 = vadd.f32 %v446, %v450
  %v455 = vadd.f32 %v447, %v451
  %v456 = vadd.f32 %v448, %v452
  %457 = vst.msk [vmem:[#allocation3] sm:$0xff] %vm49, %v453
  %458 = vst.msk [vmem:[#allocation3 + $0x8] sm:$0xff] %vm49, %v454
  %459 = vst.msk [vmem:[#allocation3 + $0x10] sm:$0xff] %vm49, %v455
  %460 = vst.msk [vmem:[#allocation3 + $0x18] sm:$0xff] %vm49, %v456
  %v461 = vld [vmem:[#allocation2] sm:$0xff]
  %v462 = vld [vmem:[#allocation2 + $0x8] sm:$0xff]
  %v463 = vld [vmem:[#allocation2 + $0x10] sm:$0xff]
  %v464 = vld [vmem:[#allocation2 + $0x18] sm:$0xff]
  %v465 = vmul.f32 %v461, 0.25
  %v466 = vmul.f32 %v462, 0.25
  %v467 = vmul.f32 %v463, 0.25
  %v468 = vmul.f32 %v464, 0.25
  %v469 = vld [vmem:[#allocation3] sm:$0xff]
  %v470 = vld [vmem:[#allocation3 + $0x8] sm:$0xff]
  %v471 = vld [vmem:[#allocation3 + $0x10] sm:$0xff]
  %v472 = vld [vmem:[#allocation3 + $0x18] sm:$0xff]
  %v473 = vmul.f32 %v469, 0.25
  %v474 = vmul.f32 %v470, 0.25
  %v475 = vmul.f32 %v471, 0.25
  %v476 = vmul.f32 %v472, 0.25
  %v477 = vmul.f32 %v465, %v465
  %v478 = vmul.f32 %v466, %v466
  %v479 = vmul.f32 %v467, %v467
  %v480 = vmul.f32 %v468, %v468
  %v481 = vsub.f32 %v473, %v477
  %v482 = vsub.f32 %v474, %v478
  %v483 = vsub.f32 %v475, %v479
  %v484 = vsub.f32 %v476, %v480
  %v485 = vmax.f32 %v481, 0.0
  %v486 = vmax.f32 %v482, 0.0
  %v487 = vmax.f32 %v483, 0.0
  %v488 = vmax.f32 %v484, 0.0
  %v489 = vld [vmem:[%s3] sm:$0xff]
  %v490 = vld [vmem:[%s3 + $0x8] sm:$0xff]
  %v491 = vld [vmem:[%s3 + $0x10] sm:$0xff]
  %v492 = vld [vmem:[%s3 + $0x18] sm:$0xff]
  %v493 = vadd.f32 %v485, 1e-05
  %v494 = vadd.f32 %v486, 1e-05
  %v495 = vadd.f32 %v487, 1e-05
  %v496 = vadd.f32 %v488, 1e-05
  %v497 = vrsqrt.pop %v493
  %v498 = vrsqrt.pop %v494
  %v499 = vrsqrt.pop %v495
  %v500 = vrsqrt.pop %v496
  %v501 = vmul.f32 %v489, %v497
  %v502 = vmul.f32 %v490, %v498
  %v503 = vmul.f32 %v491, %v499
  %v504 = vmul.f32 %v492, %v500
  %v505 = vld [vmem:[%s4] sm:$0xff]
  %v506 = vld [vmem:[%s4 + $0x8] sm:$0xff]
  %v507 = vld [vmem:[%s4 + $0x10] sm:$0xff]
  %v508 = vld [vmem:[%s4 + $0x18] sm:$0xff]
  %v509 = vmul.f32 %v465, %v501
  %v510 = vmul.f32 %v466, %v502
  %v511 = vmul.f32 %v467, %v503
  %v512 = vmul.f32 %v468, %v504
  %v513 = vsub.f32 %v505, %v509
  %v514 = vsub.f32 %v506, %v510
  %v515 = vsub.f32 %v507, %v511
  %v516 = vsub.f32 %v508, %v512
  %v517 = vld [vmem:[%s5] sm:$0xff]
  %v518 = vld [vmem:[%s5 + $0x8] sm:$0xff]
  %v519 = vld [vmem:[%s5 + $0x10] sm:$0xff]
  %v520 = vld [vmem:[%s5 + $0x18] sm:$0xff]
  %v521 = vmul.f32 %v517, %v501
  %v522 = vmul.f32 %v518, %v502
  %v523 = vmul.f32 %v519, %v503
  %v524 = vmul.f32 %v520, %v504
  %v525 = vadd.f32 %v521, %v513
  %v526 = vadd.f32 %v522, %v514
  %v527 = vadd.f32 %v523, %v515
  %v528 = vadd.f32 %v524, %v516
  %529 = vst.msk [vmem:[%s5] sm:$0xff] %vm49, %v525
  %530 = vst.msk [vmem:[%s5 + $0x8] sm:$0xff] %vm49, %v526
  %531 = vst.msk [vmem:[%s5 + $0x10] sm:$0xff] %vm49, %v527
  %532 = vst.msk [vmem:[%s5 + $0x18] sm:$0xff] %vm49, %v528
  %v533 = vld [vmem:[%s234] sm:$0xff]
  %v534 = vld [vmem:[%s234 + $0x8] sm:$0xff]
  %v535 = vld [vmem:[%s234 + $0x10] sm:$0xff]
  %v536 = vld [vmem:[%s234 + $0x18] sm:$0xff]
  %v537 = vmul.f32 %v533, %v501
  %v538 = vmul.f32 %v534, %v502
  %v539 = vmul.f32 %v535, %v503
  %v540 = vmul.f32 %v536, %v504
  %v541 = vadd.f32 %v537, %v513
  %v542 = vadd.f32 %v538, %v514
  %v543 = vadd.f32 %v539, %v515
  %v544 = vadd.f32 %v540, %v516
  %545 = vst.msk [vmem:[%s234] sm:$0xff] %vm49, %v541
  %546 = vst.msk [vmem:[%s234 + $0x8] sm:$0xff] %vm49, %v542
  %547 = vst.msk [vmem:[%s234 + $0x10] sm:$0xff] %vm49, %v543
  %548 = vst.msk [vmem:[%s234 + $0x18] sm:$0xff] %vm49, %v544
  %v549 = vld [vmem:[%s331] sm:$0xff]
  %v550 = vld [vmem:[%s331 + $0x8] sm:$0xff]
  %v551 = vld [vmem:[%s331 + $0x10] sm:$0xff]
  %v552 = vld [vmem:[%s331 + $0x18] sm:$0xff]
  %v553 = vmul.f32 %v549, %v501
  %v554 = vmul.f32 %v550, %v502
  %v555 = vmul.f32 %v551, %v503
  %v556 = vmul.f32 %v552, %v504
  %v557 = vadd.f32 %v553, %v513
  %v558 = vadd.f32 %v554, %v514
  %v559 = vadd.f32 %v555, %v515
  %v560 = vadd.f32 %v556, %v516
  %561 = vst.msk [vmem:[%s331] sm:$0xff] %vm49, %v557
  %562 = vst.msk [vmem:[%s331 + $0x8] sm:$0xff] %vm49, %v558
  %563 = vst.msk [vmem:[%s331 + $0x10] sm:$0xff] %vm49, %v559
  %564 = vst.msk [vmem:[%s331 + $0x18] sm:$0xff] %vm49, %v560
  %v565 = vld [vmem:[%s428] sm:$0xff]
  %v566 = vld [vmem:[%s428 + $0x8] sm:$0xff]
  %v567 = vld [vmem:[%s428 + $0x10] sm:$0xff]
  %v568 = vld [vmem:[%s428 + $0x18] sm:$0xff]
  %v569 = vmul.f32 %v565, %v501
  %v570 = vmul.f32 %v566, %v502
  %v571 = vmul.f32 %v567, %v503
  %v572 = vmul.f32 %v568, %v504
  %v573 = vadd.f32 %v569, %v513
  %v574 = vadd.f32 %v570, %v514
  %v575 = vadd.f32 %v571, %v515
  %v576 = vadd.f32 %v572, %v516
  %577 = vst.msk [vmem:[%s428] sm:$0xff] %vm49, %v573
  %578 = vst.msk [vmem:[%s428 + $0x8] sm:$0xff] %vm49, %v574
  %579 = vst.msk [vmem:[%s428 + $0x10] sm:$0xff] %vm49, %v575
  %580 = vst.msk [vmem:[%s428 + $0x18] sm:$0xff] %vm49, %v576
  // Predicated region
  $region22: #{tpu_custom_call.1} parent=0 // pred_check
    _
  $region23: #{tpu_custom_call.1} parent=0 // pred_check_branch
    %582 = sbr.rel (0) target = $region25
  $region24: #{tpu_custom_call.1} parent=0 // pred_region
    _
  $region25: #{tpu_custom_call.1} parent=0 // pred_fallthru
    _
  // Predicated region
  $region26: #{tpu_custom_call.1} parent=0 // pred_check
    _
  $region27: #{tpu_custom_call.1} parent=0 // pred_check_branch
    %584 = sbr.rel (0) target = $region29
  $region28: #{tpu_custom_call.1} parent=0 // pred_region
    _
  $region29: #{tpu_custom_call.1} parent=0 // pred_fallthru
    _

// kernel: tpu_custom_call.1
$region0: #{tpu_custom_call.1}
  #allocation0 [shape = 'u32[]', space=smem, size = 0x4, offset = 0x4, fixed_abs, tag = 'smem constant byte address 0x4 - core index']
  #allocation1 [shape = 'u32[144,128]{1,0:T(1,128)}', space=vmem, size = 0x12000, scoped, tag = 'internal scratch']
  #allocation2 [shape = 'f32[32,16]{1,0:T(8,128)}', space=vmem, size = 0x4000, scoped, tag = 'scratch operand']
  #allocation3 [shape = 'f32[32,16]{1,0:T(8,128)}', space=vmem, size = 0x4000, scoped, tag = 'scratch operand']
  %s0 = inlined_call_operand.vmem [shape: f32[4,32,16], index: 0, kind: input, shape index: {}]
  %s1 = inlined_call_operand.vmem [shape: bf16[32,32], index: 1, kind: input, shape index: {}]
  %s2 = inlined_call_operand.vmem [shape: f32[32,1], index: 2, kind: input, shape index: {}]
  %s3 = inlined_call_operand.vmem [shape: f32[32,16], index: 3, kind: input, shape index: {}]
  %s4 = inlined_call_operand.vmem [shape: f32[32,16], index: 4, kind: input, shape index: {}]
  %s5 = inlined_call_operand.vmem [shape: f32[4,32,16], index: 5, kind: output, shape index: {}]
  %s6 = sld [smem:[#allocation0]]
  $region30: #{tpu_custom_call.1} parent=0
    _
  %s8 = ssub.s32 1, %s6
  %s9 = scalar_select 0, %s8, %s6
  // Predicated region
  $region2: #{tpu_custom_call.1} parent=0 // pred_check
    _
  $region3: #{tpu_custom_call.1} parent=0 // pred_check_branch
    %11 = sbr.rel (0) target = $region5
  $region4: #{tpu_custom_call.1} parent=0 // pred_region
    _
  $region5: #{tpu_custom_call.1} parent=0 // pred_fallthru
    _
  // Predicated region
  $region6: #{tpu_custom_call.1} parent=0 // pred_check
    _
  $region7: #{tpu_custom_call.1} parent=0 // pred_check_branch
    %13 = sbr.rel (0) target = $region9
  $region8: #{tpu_custom_call.1} parent=0 // pred_region
    _
  $region9: #{tpu_custom_call.1} parent=0 // pred_fallthru
    _
  // Predicated region
  $region10: #{tpu_custom_call.1} parent=0 // pred_check
    _
  $region11: #{tpu_custom_call.1} parent=0 // pred_check_branch
    %15 = sbr.rel (0) target = $region13
  $region12: #{tpu_custom_call.1} parent=0 // pred_region
    _
  $region13: #{tpu_custom_call.1} parent=0 // pred_fallthru
    _
  // Predicated region
  $region14: #{tpu_custom_call.1} parent=0 // pred_check
    _
  $region15: #{tpu_custom_call.1} parent=0 // pred_check_branch
    %17 = sbr.rel (0) target = $region17
  $region16: #{tpu_custom_call.1} parent=0 // pred_region
    _
  $region17: #{tpu_custom_call.1} parent=0 // pred_fallthru
    _
  // Predicated region
  $region18: #{tpu_custom_call.1} parent=0 // pred_check
    _
  $region19: #{tpu_custom_call.1} parent=0 // pred_check_branch
    %19 = sbr.rel (0) target = $region21
  $region20: #{tpu_custom_call.1} parent=0 // pred_region
    _
  $region21: #{tpu_custom_call.1} parent=0 // pred_fallthru
    _
  %v21 = vld [vmem:[%s1] sm:$0xf]
  %v22 = vld [vmem:[%s1 + $0x4] sm:$0xf]
  %v23 = vld [vmem:[%s1 + $0x8] sm:$0xf]
  %v24 = vld [vmem:[%s1 + $0xc] sm:$0xf]
  %v25 = vld [vmem:[%s2] sm:$0xff]
  %v26 = vld [vmem:[%s2 + $0x8] sm:$0xff]
  %v27 = vld [vmem:[%s2 + $0x10] sm:$0xff]
  %v28 = vld [vmem:[%s2 + $0x18] sm:$0xff]
  %30 = vset.pattern.permute.xlu0 0
  %31 = vperm.xlu0 %30, %v25
  %v32 = vpop.permute.xlu0 %31
  %35 = vset.pattern.permute.xlu0 0
  %36 = vperm.xlu0 %35, %v26
  %v37 = vpop.permute.xlu0 %36
  %40 = vset.pattern.permute.xlu0 0
  %41 = vperm.xlu0 %40, %v27
  %v42 = vpop.permute.xlu0 %41
  %45 = vset.pattern.permute.xlu0 0
  %46 = vperm.xlu0 %45, %v28
  %v47 = vpop.permute.xlu0 %46
  %vm49 = vcmask 130048
  %50 = vst.msk [vmem:[#allocation2] sm:$0xff] %vm49, 0.0
  %51 = vst.msk [vmem:[#allocation2 + $0x8] sm:$0xff] %vm49, 0.0
  %52 = vst.msk [vmem:[#allocation2 + $0x10] sm:$0xff] %vm49, 0.0
  %53 = vst.msk [vmem:[#allocation2 + $0x18] sm:$0xff] %vm49, 0.0
  %54 = vst.msk [vmem:[#allocation3] sm:$0xff] %vm49, 0.0
  %55 = vst.msk [vmem:[#allocation3 + $0x8] sm:$0xff] %vm49, 0.0
  %56 = vst.msk [vmem:[#allocation3 + $0x10] sm:$0xff] %vm49, 0.0
  %57 = vst.msk [vmem:[#allocation3 + $0x18] sm:$0xff] %vm49, 0.0
  %v58 = vld [vmem:[%s0] sm:$0xff]
  %v59 = vld [vmem:[%s0 + $0x8] sm:$0xff]
  %v60 = vld [vmem:[%s0 + $0x10] sm:$0xff]
  %v61 = vld [vmem:[%s0 + $0x18] sm:$0xff]
  %v62 = vpack.c.bf16 %v59, %v58
  %v63 = vpack.c.bf16 %v61, %v60
  %v68 = vunpack.c.l.b16 %v21
  %v69 = vunpack.c.l.b16 %v22
  %v70 = vunpack.c.l.b16 %v23
  %v71 = vunpack.c.l.b16 %v24
  %v72 = vpack.c.b16 %v69, %v68
  %v73 = vpack.c.b16 %v71, %v70
  %vm74 = vcmask 261120
  %v76 = vsel %vm74, %v72, 0
  %v79 = vsel %vm74, %v73, 0
  %81 = vmatprep.subr.bf16.mxu0 0
  %82 = vmatpush1.bf16.msra.mxu0 %v62
  %83 = vmatprep.subr.bf16.mxu0 0
  %84 = vmatpush1.bf16.msra.mxu0 %v63
  %85 = vmatprep.subr.bf16.mxu0 0
  %86 = vmatpush1.bf16.msra.mxu0 0
  %87 = vmatprep.subr.bf16.mxu0 0
  %88 = vmatpush1.bf16.msra.mxu0 0
  %89 = vmatprep.subr.bf16.mxu0 0
  %90 = vmatpush1.bf16.msra.mxu0 0
  %91 = vmatprep.subr.bf16.mxu0 0
  %92 = vmatpush1.bf16.msra.mxu0 0
  %93 = vmatprep.subr.bf16.mxu0 0
  %94 = vmatpush1.bf16.msra.mxu0 0
  %95 = vmatprep.subr.bf16.mxu0 0
  %96 = vmatpush1.bf16.msra.mxu0 0
  %97 = vmatprep.subr.bf16.mxu0 0
  %98 = vmatpush1.bf16.msra.mxu0 0
  %99 = vmatprep.subr.bf16.mxu0 0
  %100 = vmatpush1.bf16.msra.mxu0 0
  %101 = vmatprep.subr.bf16.mxu0 0
  %102 = vmatpush1.bf16.msra.mxu0 0
  %103 = vmatprep.subr.bf16.mxu0 0
  %104 = vmatpush1.bf16.msra.mxu0 0
  %105 = vmatprep.subr.bf16.mxu0 0
  %106 = vmatpush1.bf16.msra.mxu0 0
  %107 = vmatprep.subr.bf16.mxu0 0
  %108 = vmatpush1.bf16.msra.mxu0 0
  %109 = vmatprep.subr.bf16.mxu0 0
  %110 = vmatpush1.bf16.msra.mxu0 0
  %111 = vmatprep.subr.bf16.mxu0 0
  %112 = vmatpush1.bf16.msra.mxu0 0
  %113 = vmatprep.mubr.bf16.mxu0 0
  %114 = vmatmul.mubr.bf16.gmra.mrb[0].mxu0 %v76
  %v115 = vpop.f32.mrb[0].mxu0
  %v116 = vadd.f32 %v32, %v115
  %v117 = vpop.f32.mrb[0].mxu0
  %v118 = vpop.f32.mrb[0].mxu0
  %v119 = vadd.f32 %v37, %v118
  %v120 = vpop.f32.mrb[0].mxu0
  %121 = vmatprep.mubr.bf16.mxu0 0
  %122 = vmatmul.mubr.bf16.gmra.mrb[0].mxu0 %v79
  %v123 = vpop.f32.mrb[0].mxu0
  %v124 = vadd.f32 %v42, %v123
  %v125 = vpop.f32.mrb[0].mxu0
  %v126 = vpop.f32.mrb[0].mxu0
  %v127 = vadd.f32 %v47, %v126
  %v128 = vpop.f32.mrb[0].mxu0
  %129 = vdwg.mxu0
  %v130 = vmax.f32 %v116, 0.0
  %v131 = vmax.f32 %v119, 0.0
  %v132 = vmax.f32 %v124, 0.0
  %v133 = vmax.f32 %v127, 0.0
  %v134 = vadd.f32 %v58, %v130
  %v135 = vadd.f32 %v59, %v131
  %v136 = vadd.f32 %v60, %v132
  %v137 = vadd.f32 %v61, %v133
  %138 = vst.msk [vmem:[%s5] sm:$0xff] %vm49, %v134
  %139 = vst.msk [vmem:[%s5 + $0x8] sm:$0xff] %vm49, %v135
  %140 = vst.msk [vmem:[%s5 + $0x10] sm:$0xff] %vm49, %v136
  %141 = vst.msk [vmem:[%s5 + $0x18] sm:$0xff] %vm49, %v137
  %v142 = vld [vmem:[#allocation2] sm:$0xff]
  %v143 = vld [vmem:[#allocation2 + $0x8] sm:$0xff]
  %v144 = vld [vmem:[#allocation2 + $0x10] sm:$0xff]
  %v145 = vld [vmem:[#allocation2 + $0x18] sm:$0xff]
  %v146 = vadd.f32 %v142, %v134
  %v147 = vadd.f32 %v143, %v135
  %v148 = vadd.f32 %v144, %v136
  %v149 = vadd.f32 %v145, %v137
  %150 = vst.msk [vmem:[#allocation2] sm:$0xff] %vm49, %v146
  %151 = vst.msk [vmem:[#allocation2 + $0x8] sm:$0xff] %vm49, %v147
  %152 = vst.msk [vmem:[#allocation2 + $0x10] sm:$0xff] %vm49, %v148
  %153 = vst.msk [vmem:[#allocation2 + $0x18] sm:$0xff] %vm49, %v149
  %v154 = vld [vmem:[#allocation3] sm:$0xff]
  %v155 = vld [vmem:[#allocation3 + $0x8] sm:$0xff]
  %v156 = vld [vmem:[#allocation3 + $0x10] sm:$0xff]
  %v157 = vld [vmem:[#allocation3 + $0x18] sm:$0xff]
  %v158 = vmul.f32 %v134, %v134
  %v159 = vmul.f32 %v135, %v135
  %v160 = vmul.f32 %v136, %v136
  %v161 = vmul.f32 %v137, %v137
  %v162 = vadd.f32 %v154, %v158
  %v163 = vadd.f32 %v155, %v159
  %v164 = vadd.f32 %v156, %v160
  %v165 = vadd.f32 %v157, %v161
  %166 = vst.msk [vmem:[#allocation3] sm:$0xff] %vm49, %v162
  %167 = vst.msk [vmem:[#allocation3 + $0x8] sm:$0xff] %vm49, %v163
  %168 = vst.msk [vmem:[#allocation3 + $0x10] sm:$0xff] %vm49, %v164
  %169 = vst.msk [vmem:[#allocation3 + $0x18] sm:$0xff] %vm49, %v165
  %s170 = scalar_lea.vmem %s0, 32
  %v171 = vld [vmem:[%s170] sm:$0xff]
  %v172 = vld [vmem:[%s170 + $0x8] sm:$0xff]
  %v173 = vld [vmem:[%s170 + $0x10] sm:$0xff]
  %v174 = vld [vmem:[%s170 + $0x18] sm:$0xff]
  %v175 = vpack.c.bf16 %v172, %v171
  %v176 = vpack.c.bf16 %v174, %v173
  %177 = vmatprep.subr.bf16.mxu0 0
  %178 = vmatpush1.bf16.msra.mxu0 %v175
  %179 = vmatprep.subr.bf16.mxu0 0
  %180 = vmatpush1.bf16.msra.mxu0 %v176
  %181 = vmatprep.subr.bf16.mxu0 0
  %182 = vmatpush1.bf16.msra.mxu0 0
  %183 = vmatprep.subr.bf16.mxu0 0
  %184 = vmatpush1.bf16.msra.mxu0 0
  %185 = vmatprep.subr.bf16.mxu0 0
  %186 = vmatpush1.bf16.msra.mxu0 0
  %187 = vmatprep.subr.bf16.mxu0 0
  %188 = vmatpush1.bf16.msra.mxu0 0
  %189 = vmatprep.subr.bf16.mxu0 0
  %190 = vmatpush1.bf16.msra.mxu0 0
  %191 = vmatprep.subr.bf16.mxu0 0
  %192 = vmatpush1.bf16.msra.mxu0 0
  %193 = vmatprep.subr.bf16.mxu0 0
  %194 = vmatpush1.bf16.msra.mxu0 0
  %195 = vmatprep.subr.bf16.mxu0 0
  %196 = vmatpush1.bf16.msra.mxu0 0
  %197 = vmatprep.subr.bf16.mxu0 0
  %198 = vmatpush1.bf16.msra.mxu0 0
  %199 = vmatprep.subr.bf16.mxu0 0
  %200 = vmatpush1.bf16.msra.mxu0 0
  %201 = vmatprep.subr.bf16.mxu0 0
  %202 = vmatpush1.bf16.msra.mxu0 0
  %203 = vmatprep.subr.bf16.mxu0 0
  %204 = vmatpush1.bf16.msra.mxu0 0
  %205 = vmatprep.subr.bf16.mxu0 0
  %206 = vmatpush1.bf16.msra.mxu0 0
  %207 = vmatprep.subr.bf16.mxu0 0
  %208 = vmatpush1.bf16.msra.mxu0 0
  %209 = vmatprep.mubr.bf16.mxu0 0
  %210 = vmatmul.mubr.bf16.gmra.mrb[0].mxu0 %v76
  %v211 = vpop.f32.mrb[0].mxu0
  %v212 = vadd.f32 %v32, %v211
  %v213 = vpop.f32.mrb[0].mxu0
  %v214 = vpop.f32.mrb[0].mxu0
  %v215 = vadd.f32 %v37, %v214
  %v216 = vpop.f32.mrb[0].mxu0
  %217 = vmatprep.mubr.bf16.mxu0 0
  %218 = vmatmul.mubr.bf16.gmra.mrb[0].mxu0 %v79
  %v219 = vpop.f32.mrb[0].mxu0
  %v220 = vadd.f32 %v42, %v219
  %v221 = vpop.f32.mrb[0].mxu0
  %v222 = vpop.f32.mrb[0].mxu0
  %v223 = vadd.f32 %v47, %v222
  %v224 = vpop.f32.mrb[0].mxu0
  %225 = vdwg.mxu0
  %v226 = vmax.f32 %v212, 0.0
  %v227 = vmax.f32 %v215, 0.0
  %v228 = vmax.f32 %v220, 0.0
  %v229 = vmax.f32 %v223, 0.0
  %v230 = vadd.f32 %v171, %v226
  %v231 = vadd.f32 %v172, %v227
  %v232 = vadd.f32 %v173, %v228
  %v233 = vadd.f32 %v174, %v229
  %s234 = scalar_lea.vmem %s5, 32
  %235 = vst.msk [vmem:[%s234] sm:$0xff] %vm49, %v230
  %236 = vst.msk [vmem:[%s234 + $0x8] sm:$0xff] %vm49, %v231
  %237 = vst.msk [vmem:[%s234 + $0x10] sm:$0xff] %vm49, %v232
  %238 = vst.msk [vmem:[%s234 + $0x18] sm:$0xff] %vm49, %v233
  %v239 = vld [vmem:[#allocation2] sm:$0xff]
  %v240 = vld [vmem:[#allocation2 + $0x8] sm:$0xff]
  %v241 = vld [vmem:[#allocation2 + $0x10] sm:$0xff]
  %v242 = vld [vmem:[#allocation2 + $0x18] sm:$0xff]
  %v243 = vadd.f32 %v239, %v230
  %v244 = vadd.f32 %v240, %v231
  %v245 = vadd.f32 %v241, %v232
  %v246 = vadd.f32 %v242, %v233
  %247 = vst.msk [vmem:[#allocation2] sm:$0xff] %vm49, %v243
  %248 = vst.msk [vmem:[#allocation2 + $0x8] sm:$0xff] %vm49, %v244
  %249 = vst.msk [vmem:[#allocation2 + $0x10] sm:$0xff] %vm49, %v245
  %250 = vst.msk [vmem:[#allocation2 + $0x18] sm:$0xff] %vm49, %v246
  %v251 = vld [vmem:[#allocation3] sm:$0xff]
  %v252 = vld [vmem:[#allocation3 + $0x8] sm:$0xff]
  %v253 = vld [vmem:[#allocation3 + $0x10] sm:$0xff]
  %v254 = vld [vmem:[#allocation3 + $0x18] sm:$0xff]
  %v255 = vmul.f32 %v230, %v230
  %v256 = vmul.f32 %v231, %v231
  %v257 = vmul.f32 %v232, %v232
  %v258 = vmul.f32 %v233, %v233
  %v259 = vadd.f32 %v251, %v255
  %v260 = vadd.f32 %v252, %v256
  %v261 = vadd.f32 %v253, %v257
  %v262 = vadd.f32 %v254, %v258
  %263 = vst.msk [vmem:[#allocation3] sm:$0xff] %vm49, %v259
  %264 = vst.msk [vmem:[#allocation3 + $0x8] sm:$0xff] %vm49, %v260
  %265 = vst.msk [vmem:[#allocation3 + $0x10] sm:$0xff] %vm49, %v261
  %266 = vst.msk [vmem:[#allocation3 + $0x18] sm:$0xff] %vm49, %v262
  %s267 = scalar_lea.vmem %s0, 64
  %v268 = vld [vmem:[%s267] sm:$0xff]
  %v269 = vld [vmem:[%s267 + $0x8] sm:$0xff]
  %v270 = vld [vmem:[%s267 + $0x10] sm:$0xff]
  %v271 = vld [vmem:[%s267 + $0x18] sm:$0xff]
  %v272 = vpack.c.bf16 %v269, %v268
  %v273 = vpack.c.bf16 %v271, %v270
  %274 = vmatprep.subr.bf16.mxu0 0
  %275 = vmatpush1.bf16.msra.mxu0 %v272
  %276 = vmatprep.subr.bf16.mxu0 0
  %277 = vmatpush1.bf16.msra.mxu0 %v273
  %278 = vmatprep.subr.bf16.mxu0 0
  %279 = vmatpush1.bf16.msra.mxu0 0
  %280 = vmatprep.subr.bf16.mxu0 0
  %281 = vmatpush1.bf16.msra.mxu0 0
  %282 = vmatprep.subr.bf16.mxu0 0
  %283 = vmatpush1.bf16.msra.mxu0 0
  %284 = vmatprep.subr.bf16.mxu0 0
  %285 = vmatpush1.bf16.msra.mxu0 0
  %286 = vmatprep.subr.bf16.mxu0 0
  %287 = vmatpush1.bf16.msra.mxu0 0
  %288 = vmatprep.subr.bf16.mxu0 0
  %289 = vmatpush1.bf16.msra.mxu0 0
  %290 = vmatprep.subr.bf16.mxu0 0
  %291 = vmatpush1.bf16.msra.mxu0 0
  %292 = vmatprep.subr.bf16.mxu0 0
  %293 = vmatpush1.bf16.msra.mxu0 0
  %294 = vmatprep.subr.bf16.mxu0 0
  %295 = vmatpush1.bf16.msra.mxu0 0
  %296 = vmatprep.subr.bf16.mxu0 0
  %297 = vmatpush1.bf16.msra.mxu0 0
  %298 = vmatprep.subr.bf16.mxu0 0
  %299 = vmatpush1.bf16.msra.mxu0 0
  %300 = vmatprep.subr.bf16.mxu0 0
  %301 = vmatpush1.bf16.msra.mxu0 0
  %302 = vmatprep.subr.bf16.mxu0 0
  %303 = vmatpush1.bf16.msra.mxu0 0
  %304 = vmatprep.subr.bf16.mxu0 0
  %305 = vmatpush1.bf16.msra.mxu0 0
  %306 = vmatprep.mubr.bf16.mxu0 0
  %307 = vmatmul.mubr.bf16.gmra.mrb[0].mxu0 %v76
  %v308 = vpop.f32.mrb[0].mxu0
  %v309 = vadd.f32 %v32, %v308
  %v310 = vpop.f32.mrb[0].mxu0
  %v311 = vpop.f32.mrb[0].mxu0
  %v312 = vadd.f32 %v37, %v311
  %v313 = vpop.f32.mrb[0].mxu0
  %314 = vmatprep.mubr.bf16.mxu0 0
  %315 = vmatmul.mubr.bf16.gmra.mrb[0].mxu0 %v79
  %v316 = vpop.f32.mrb[0].mxu0
  %v317 = vadd.f32 %v42, %v316
  %v318 = vpop.f32.mrb[0].mxu0
  %v319 = vpop.f32.mrb[0].mxu0
  %v320 = vadd.f32 %v47, %v319
  %v321 = vpop.f32.mrb[0].mxu0
  %322 = vdwg.mxu0
  %v323 = vmax.f32 %v309, 0.0
  %v324 = vmax.f32 %v312, 0.0
  %v325 = vmax.f32 %v317, 0.0
  %v326 = vmax.f32 %v320, 0.0
  %v327 = vadd.f32 %v268, %v323
  %v328 = vadd.f32 %v269, %v324
  %v329 = vadd.f32 %v270, %v325
  %v330 = vadd.f32 %v271, %v326
  %s331 = scalar_lea.vmem %s5, 64
  %332 = vst.msk [vmem:[%s331] sm:$0xff] %vm49, %v327
  %333 = vst.msk [vmem:[%s331 + $0x8] sm:$0xff] %vm49, %v328
  %334 = vst.msk [vmem:[%s331 + $0x10] sm:$0xff] %vm49, %v329
  %335 = vst.msk [vmem:[%s331 + $0x18] sm:$0xff] %vm49, %v330
  %v336 = vld [vmem:[#allocation2] sm:$0xff]
  %v337 = vld [vmem:[#allocation2 + $0x8] sm:$0xff]
  %v338 = vld [vmem:[#allocation2 + $0x10] sm:$0xff]
  %v339 = vld [vmem:[#allocation2 + $0x18] sm:$0xff]
  %v340 = vadd.f32 %v336, %v327
  %v341 = vadd.f32 %v337, %v328
  %v342 = vadd.f32 %v338, %v329
  %v343 = vadd.f32 %v339, %v330
  %344 = vst.msk [vmem:[#allocation2] sm:$0xff] %vm49, %v340
  %345 = vst.msk [vmem:[#allocation2 + $0x8] sm:$0xff] %vm49, %v341
  %346 = vst.msk [vmem:[#allocation2 + $0x10] sm:$0xff] %vm49, %v342
  %347 = vst.msk [vmem:[#allocation2 + $0x18] sm:$0xff] %vm49, %v343
  %v348 = vld [vmem:[#allocation3] sm:$0xff]
  %v349 = vld [vmem:[#allocation3 + $0x8] sm:$0xff]
  %v350 = vld [vmem:[#allocation3 + $0x10] sm:$0xff]
  %v351 = vld [vmem:[#allocation3 + $0x18] sm:$0xff]
  %v352 = vmul.f32 %v327, %v327
  %v353 = vmul.f32 %v328, %v328
  %v354 = vmul.f32 %v329, %v329
  %v355 = vmul.f32 %v330, %v330
  %v356 = vadd.f32 %v348, %v352
  %v357 = vadd.f32 %v349, %v353
  %v358 = vadd.f32 %v350, %v354
  %v359 = vadd.f32 %v351, %v355
  %360 = vst.msk [vmem:[#allocation3] sm:$0xff] %vm49, %v356
  %361 = vst.msk [vmem:[#allocation3 + $0x8] sm:$0xff] %vm49, %v357
  %362 = vst.msk [vmem:[#allocation3 + $0x10] sm:$0xff] %vm49, %v358
  %363 = vst.msk [vmem:[#allocation3 + $0x18] sm:$0xff] %vm49, %v359
  %s364 = scalar_lea.vmem %s0, 96
  %v365 = vld [vmem:[%s364] sm:$0xff]
  %v366 = vld [vmem:[%s364 + $0x8] sm:$0xff]
  %v367 = vld [vmem:[%s364 + $0x10] sm:$0xff]
  %v368 = vld [vmem:[%s364 + $0x18] sm:$0xff]
  %v369 = vpack.c.bf16 %v366, %v365
  %v370 = vpack.c.bf16 %v368, %v367
  %371 = vmatprep.subr.bf16.mxu0 0
  %372 = vmatpush1.bf16.msra.mxu0 %v369
  %373 = vmatprep.subr.bf16.mxu0 0
  %374 = vmatpush1.bf16.msra.mxu0 %v370
  %375 = vmatprep.subr.bf16.mxu0 0
  %376 = vmatpush1.bf16.msra.mxu0 0
  %377 = vmatprep.subr.bf16.mxu0 0
  %378 = vmatpush1.bf16.msra.mxu0 0
  %379 = vmatprep.subr.bf16.mxu0 0
  %380 = vmatpush1.bf16.msra.mxu0 0
  %381 = vmatprep.subr.bf16.mxu0 0
  %382 = vmatpush1.bf16.msra.mxu0 0
  %383 = vmatprep.subr.bf16.mxu0 0
  %384 = vmatpush1.bf16.msra.mxu0 0
  %385 = vmatprep.subr.bf16.mxu0 0
  %386 = vmatpush1.bf16.msra.mxu0 0
  %387 = vmatprep.subr.bf16.mxu0 0
  %388 = vmatpush1.bf16.msra.mxu0 0
  %389 = vmatprep.subr.bf16.mxu0 0
  %390 = vmatpush1.bf16.msra.mxu0 0
  %391 = vmatprep.subr.bf16.mxu0 0
  %392 = vmatpush1.bf16.msra.mxu0 0
  %393 = vmatprep.subr.bf16.mxu0 0
  %394 = vmatpush1.bf16.msra.mxu0 0
  %395 = vmatprep.subr.bf16.mxu0 0
  %396 = vmatpush1.bf16.msra.mxu0 0
  %397 = vmatprep.subr.bf16.mxu0 0
  %398 = vmatpush1.bf16.msra.mxu0 0
  %399 = vmatprep.subr.bf16.mxu0 0
  %400 = vmatpush1.bf16.msra.mxu0 0
  %401 = vmatprep.subr.bf16.mxu0 0
  %402 = vmatpush1.bf16.msra.mxu0 0
  %403 = vmatprep.mubr.bf16.mxu0 0
  %404 = vmatmul.mubr.bf16.gmra.mrb[0].mxu0 %v76
  %v405 = vpop.f32.mrb[0].mxu0
  %v406 = vadd.f32 %v32, %v405
  %v407 = vpop.f32.mrb[0].mxu0
  %v408 = vpop.f32.mrb[0].mxu0
  %v409 = vadd.f32 %v37, %v408
  %v410 = vpop.f32.mrb[0].mxu0
  %411 = vmatprep.mubr.bf16.mxu0 0
  %412 = vmatmul.mubr.bf16.gmra.mrb[0].mxu0 %v79
  %v413 = vpop.f32.mrb[0].mxu0
  %v414 = vadd.f32 %v42, %v413
  %v415 = vpop.f32.mrb[0].mxu0
  %v416 = vpop.f32.mrb[0].mxu0
  %v417 = vadd.f32 %v47, %v416
  %v418 = vpop.f32.mrb[0].mxu0
  %419 = vdwg.mxu0
  %v420 = vmax.f32 %v406, 0.0
  %v421 = vmax.f32 %v409, 0.0
  %v422 = vmax.f32 %v414, 0.0
  %v423 = vmax.f32 %v417, 0.0
  %v424 = vadd.f32 %v365, %v420
  %v425 = vadd.f32 %v366, %v421
  %v426 = vadd.f32 %v367, %v422
  %v427 = vadd.f32 %v368, %v423
  %s428 = scalar_lea.vmem %s5, 96
  %429 = vst.msk [vmem:[%s428] sm:$0xff] %vm49, %v424
  %430 = vst.msk [vmem:[%s428 + $0x8] sm:$0xff] %vm49, %v425
  %431 = vst.msk [vmem:[%s428 + $0x10] sm:$0xff] %vm49, %v426
  %432 = vst.msk [vmem:[%s428 + $0x18] sm:$0xff] %vm49, %v427
  %v433 = vld [vmem:[#allocation2] sm:$0xff]
  %v434 = vld [vmem:[#allocation2 + $0x8] sm:$0xff]
  %v435 = vld [vmem:[#allocation2 + $0x10] sm:$0xff]
  %v436 = vld [vmem:[#allocation2 + $0x18] sm:$0xff]
  %v437 = vadd.f32 %v433, %v424
  %v438 = vadd.f32 %v434, %v425
  %v439 = vadd.f32 %v435, %v426
  %v440 = vadd.f32 %v436, %v427
  %441 = vst.msk [vmem:[#allocation2] sm:$0xff] %vm49, %v437
  %442 = vst.msk [vmem:[#allocation2 + $0x8] sm:$0xff] %vm49, %v438
  %443 = vst.msk [vmem:[#allocation2 + $0x10] sm:$0xff] %vm49, %v439
  %444 = vst.msk [vmem:[#allocation2 + $0x18] sm:$0xff] %vm49, %v440
  %v445 = vld [vmem:[#allocation3] sm:$0xff]
  %v446 = vld [vmem:[#allocation3 + $0x8] sm:$0xff]
  %v447 = vld [vmem:[#allocation3 + $0x10] sm:$0xff]
  %v448 = vld [vmem:[#allocation3 + $0x18] sm:$0xff]
  %v449 = vmul.f32 %v424, %v424
  %v450 = vmul.f32 %v425, %v425
  %v451 = vmul.f32 %v426, %v426
  %v452 = vmul.f32 %v427, %v427
  %v453 = vadd.f32 %v445, %v449
  %v454 = vadd.f32 %v446, %v450
  %v455 = vadd.f32 %v447, %v451
  %v456 = vadd.f32 %v448, %v452
  %457 = vst.msk [vmem:[#allocation3] sm:$0xff] %vm49, %v453
  %458 = vst.msk [vmem:[#allocation3 + $0x8] sm:$0xff] %vm49, %v454
  %459 = vst.msk [vmem:[#allocation3 + $0x10] sm:$0xff] %vm49, %v455
  %460 = vst.msk [vmem:[#allocation3 + $0x18] sm:$0xff] %vm49, %v456
  %v461 = vld [vmem:[#allocation2] sm:$0xff]
  %v462 = vld [vmem:[#allocation2 + $0x8] sm:$0xff]
  %v463 = vld [vmem:[#allocation2 + $0x10] sm:$0xff]
  %v464 = vld [vmem:[#allocation2 + $0x18] sm:$0xff]
  %v465 = vmul.f32 %v461, 0.25
  %v466 = vmul.f32 %v462, 0.25
  %v467 = vmul.f32 %v463, 0.25
  %v468 = vmul.f32 %v464, 0.25
  %v469 = vld [vmem:[#allocation3] sm:$0xff]
  %v470 = vld [vmem:[#allocation3 + $0x8] sm:$0xff]
  %v471 = vld [vmem:[#allocation3 + $0x10] sm:$0xff]
  %v472 = vld [vmem:[#allocation3 + $0x18] sm:$0xff]
  %v473 = vmul.f32 %v469, 0.25
  %v474 = vmul.f32 %v470, 0.25
  %v475 = vmul.f32 %v471, 0.25
  %v476 = vmul.f32 %v472, 0.25
  %v477 = vmul.f32 %v465, %v465
  %v478 = vmul.f32 %v466, %v466
  %v479 = vmul.f32 %v467, %v467
  %v480 = vmul.f32 %v468, %v468
  %v481 = vsub.f32 %v473, %v477
  %v482 = vsub.f32 %v474, %v478
  %v483 = vsub.f32 %v475, %v479
  %v484 = vsub.f32 %v476, %v480
  %v485 = vmax.f32 %v481, 0.0
  %v486 = vmax.f32 %v482, 0.0
  %v487 = vmax.f32 %v483, 0.0
  %v488 = vmax.f32 %v484, 0.0
  %v489 = vld [vmem:[%s3] sm:$0xff]
  %v490 = vld [vmem:[%s3 + $0x8] sm:$0xff]
  %v491 = vld [vmem:[%s3 + $0x10] sm:$0xff]
  %v492 = vld [vmem:[%s3 + $0x18] sm:$0xff]
  %v493 = vadd.f32 %v485, 1e-05
  %v494 = vadd.f32 %v486, 1e-05
  %v495 = vadd.f32 %v487, 1e-05
  %v496 = vadd.f32 %v488, 1e-05
  %v497 = vrsqrt.pop %v493
  %v498 = vrsqrt.pop %v494
  %v499 = vrsqrt.pop %v495
  %v500 = vrsqrt.pop %v496
  %v501 = vmul.f32 %v489, %v497
  %v502 = vmul.f32 %v490, %v498
  %v503 = vmul.f32 %v491, %v499
  %v504 = vmul.f32 %v492, %v500
  %v505 = vld [vmem:[%s4] sm:$0xff]
  %v506 = vld [vmem:[%s4 + $0x8] sm:$0xff]
  %v507 = vld [vmem:[%s4 + $0x10] sm:$0xff]
  %v508 = vld [vmem:[%s4 + $0x18] sm:$0xff]
  %v509 = vmul.f32 %v465, %v501
  %v510 = vmul.f32 %v466, %v502
  %v511 = vmul.f32 %v467, %v503
  %v512 = vmul.f32 %v468, %v504
  %v513 = vsub.f32 %v505, %v509
  %v514 = vsub.f32 %v506, %v510
  %v515 = vsub.f32 %v507, %v511
  %v516 = vsub.f32 %v508, %v512
  %v517 = vld [vmem:[%s5] sm:$0xff]
  %v518 = vld [vmem:[%s5 + $0x8] sm:$0xff]
  %v519 = vld [vmem:[%s5 + $0x10] sm:$0xff]
  %v520 = vld [vmem:[%s5 + $0x18] sm:$0xff]
  %v521 = vmul.f32 %v517, %v501
  %v522 = vmul.f32 %v518, %v502
  %v523 = vmul.f32 %v519, %v503
  %v524 = vmul.f32 %v520, %v504
  %v525 = vadd.f32 %v521, %v513
  %v526 = vadd.f32 %v522, %v514
  %v527 = vadd.f32 %v523, %v515
  %v528 = vadd.f32 %v524, %v516
  %529 = vst.msk [vmem:[%s5] sm:$0xff] %vm49, %v525
  %530 = vst.msk [vmem:[%s5 + $0x8] sm:$0xff] %vm49, %v526
  %531 = vst.msk [vmem:[%s5 + $0x10] sm:$0xff] %vm49, %v527
  %532 = vst.msk [vmem:[%s5 + $0x18] sm:$0xff] %vm49, %v528
  %v533 = vld [vmem:[%s234] sm:$0xff]
  %v534 = vld [vmem:[%s234 + $0x8] sm:$0xff]
  %v535 = vld [vmem:[%s234 + $0x10] sm:$0xff]
  %v536 = vld [vmem:[%s234 + $0x18] sm:$0xff]
  %v537 = vmul.f32 %v533, %v501
  %v538 = vmul.f32 %v534, %v502
  %v539 = vmul.f32 %v535, %v503
  %v540 = vmul.f32 %v536, %v504
  %v541 = vadd.f32 %v537, %v513
  %v542 = vadd.f32 %v538, %v514
  %v543 = vadd.f32 %v539, %v515
  %v544 = vadd.f32 %v540, %v516
  %545 = vst.msk [vmem:[%s234] sm:$0xff] %vm49, %v541
  %546 = vst.msk [vmem:[%s234 + $0x8] sm:$0xff] %vm49, %v542
  %547 = vst.msk [vmem:[%s234 + $0x10] sm:$0xff] %vm49, %v543
  %548 = vst.msk [vmem:[%s234 + $0x18] sm:$0xff] %vm49, %v544
  %v549 = vld [vmem:[%s331] sm:$0xff]
  %v550 = vld [vmem:[%s331 + $0x8] sm:$0xff]
  %v551 = vld [vmem:[%s331 + $0x10] sm:$0xff]
  %v552 = vld [vmem:[%s331 + $0x18] sm:$0xff]
  %v553 = vmul.f32 %v549, %v501
  %v554 = vmul.f32 %v550, %v502
  %v555 = vmul.f32 %v551, %v503
  %v556 = vmul.f32 %v552, %v504
  %v557 = vadd.f32 %v553, %v513
  %v558 = vadd.f32 %v554, %v514
  %v559 = vadd.f32 %v555, %v515
  %v560 = vadd.f32 %v556, %v516
  %561 = vst.msk [vmem:[%s331] sm:$0xff] %vm49, %v557
  %562 = vst.msk [vmem:[%s331 + $0x8] sm:$0xff] %vm49, %v558
  %563 = vst.msk [vmem:[%s331 + $0x10] sm:$0xff] %vm49, %v559
  %564 = vst.msk [vmem:[%s331 + $0x18] sm:$0xff] %vm49, %v560
  %v565 = vld [vmem:[%s428] sm:$0xff]
  %v566 = vld [vmem:[%s428 + $0x8] sm:$0xff]
  %v567 = vld [vmem:[%s428 + $0x10] sm:$0xff]
  %v568 = vld [vmem:[%s428 + $0x18] sm:$0xff]
  %v569 = vmul.f32 %v565, %v501
  %v570 = vmul.f32 %v566, %v502
  %v571 = vmul.f32 %v567, %v503
  %v572 = vmul.f32 %v568, %v504
  %v573 = vadd.f32 %v569, %v513
  %v574 = vadd.f32 %v570, %v514
  %v575 = vadd.f32 %v571, %v515
  %v576 = vadd.f32 %v572, %v516
  %577 = vst.msk [vmem:[%s428] sm:$0xff] %vm49, %v573
  %578 = vst.msk [vmem:[%s428 + $0x8] sm:$0xff] %vm49, %v574
  %579 = vst.msk [vmem:[%s428 + $0x10] sm:$0xff] %vm49, %v575
  %580 = vst.msk [vmem:[%s428 + $0x18] sm:$0xff] %vm49, %v576
  // Predicated region
  $region22: #{tpu_custom_call.1} parent=0 // pred_check
    _
  $region23: #{tpu_custom_call.1} parent=0 // pred_check_branch
    %582 = sbr.rel (0) target = $region25
  $region24: #{tpu_custom_call.1} parent=0 // pred_region
    _
  $region25: #{tpu_custom_call.1} parent=0 // pred_fallthru
    _
  // Predicated region
  $region26: #{tpu_custom_call.1} parent=0 // pred_check
    _
  $region27: #{tpu_custom_call.1} parent=0 // pred_check_branch
    %584 = sbr.rel (0) target = $region29
  $region28: #{tpu_custom_call.1} parent=0 // pred_region
    _
  $region29: #{tpu_custom_call.1} parent=0 // pred_fallthru
    _

</llo_original>
